<compile_context>
chip_gen: v7x
topology: tpu7x:2x2x1
jax: 0.10.0
libtpu: 0.0.40
codegen_flags: <defaults>
</compile_context>

<pallas_src>
import functools

import jax
import jax.numpy as jnp
import numpy as np
from jax import lax
from jax.experimental import pallas as pl
from jax.experimental.pallas import tpu as pltpu

# Large finite negative for masking: safe under bf16/f32 max-subtraction.
_NEG_INF = -1e30


# ---------------------------------------------------------------------------
# Pallas kernel (one batch tile of `batch_tile` elements per grid step)
# ---------------------------------------------------------------------------
def _mha_kernel(x_ref, w_ref, b_ref, rep_ref, hsel_ref, cmask_ref, seg_ref,
                o_ref, am_ref, *, num_heads, batch_tile):
    """x_ref: (TB, P, Din); w_ref: (Din, 3D) bf16 (Wq|Wk|Wv, scale folded into
    Wq); b_ref: (1, 3D) f32.  Constants (built once in the wrapper, resident):
      rep_ref  : (H*P, P)   bf16 0/1   rep[r, c]   = (r % P == c)
      hsel_ref : (H*P, D)   bf16 0/1   hsel[r, n]  = (r // P == n // head_dim)
      cmask_ref: (P, H*P)   f32        0 where causal-visible else -1e30
      seg_ref  : (H*P, H*P) bf16 0/1   seg[r, c]   = (r // P == c // P)
    Outputs:
      o_ref : (TB, P, D)  attention output, heads flattened '(h d)'
      am_ref: (TB, P, P)  attention probabilities averaged over heads
    """
    TB = batch_tile
    P = x_ref.shape[1]
    Din = x_ref.shape[2]
    D = o_ref.shape[2]
    H = num_heads
    inv_h = 1.0 / H

    # Fused q|k|v projection for every row of the batch tile in one MXU push.
    x = x_ref[...].reshape(TB * P, Din).astype(jnp.bfloat16)
    qkv = jnp.dot(x, w_ref[...], preferred_element_type=jnp.float32) + b_ref[...]

    rep = rep_ref[...]
    hsel = hsel_ref[...]
    cmask = cmask_ref[...]
    seg = seg_ref[...]

    for b in range(TB):   # static unroll; TB is tiny (1 or B)
        rows = slice(b * P, (b + 1) * P)
        q = qkv[rows, 0:D].astype(jnp.bfloat16)        # scale already in Wq/bq
        k = qkv[rows, D:2 * D].astype(jnp.bfloat16)
        v = qkv[rows, 2 * D:3 * D].astype(jnp.bfloat16)

        # Head replication on the MXU, block-diagonal masking on the VPU.
        kblk = (jnp.dot(rep, k, preferred_element_type=jnp.float32)
                .astype(jnp.bfloat16) * hsel)          # (H*P, D)
        vblk = (jnp.dot(rep, v, preferred_element_type=jnp.float32)
                .astype(jnp.bfloat16) * hsel)          # (H*P, D)

        # All-head scores in one contraction over the feature axis:
        #   s[p, h*P + p'] = sum_{j in head h} q[p, j] * k[p', j]
        s = lax.dot_general(q, kblk, (((1,), (1,)), ((), ())),
                            preferred_element_type=jnp.float32)     # (P, H*P)
        s = s + cmask                                  # causal additive bias

        # Segmented softmax.  Global row-max subtraction is exact (softmax is
        # shift-invariant per segment); each segment's diagonal is unmasked so
        # denominators stay > 0 for realistic score ranges.
        s = s - jnp.max(s, axis=-1, keepdims=True)
        e = jnp.exp(s)                                              # (P, H*P)
        denom = jnp.dot(e.astype(jnp.bfloat16), seg,
                        preferred_element_type=jnp.float32)         # per-head sums
        a = e * pl.reciprocal(denom, approx=True)                   # EUP recip
        a_bf = a.astype(jnp.bfloat16)

        # Block-diagonal vblk makes heads land pre-flattened in '(h d)' order.
        o = jnp.dot(a_bf, vblk, preferred_element_type=jnp.float32)  # (P, D)
        o_ref[b] = o.astype(o_ref.dtype)

        # Head-mean attention map (pure overhead if the caller drops it):
        #   am[p, p'] = (1/H) * sum_h a[p, h*P + p']   -- one bf16 MXU push.
        am = jnp.dot(a_bf, rep, preferred_element_type=jnp.float32) * inv_h
        am_ref[b] = am.astype(am_ref.dtype)


# ---------------------------------------------------------------------------
# Wrapper
# ---------------------------------------------------------------------------
def multihead_attention(x, wq, bq, wkv, bkv, *, num_heads, batch_tile=1):
    """x: (B, P, Din); wq: (D, Din), wkv: (2D, Din)  (torch Linear layout)."""
    B, P, Din = x.shape
    D = wq.shape[0]
    assert D % num_heads == 0
    hd = D // num_heads
    HP = num_heads * P
    scale = (D / num_heads) ** (-0.5)

    assert B % batch_tile == 0, "batch_tile must divide B"
    # The (H*P, H*P) segment matrix and (H*P, D) k/v blocks make VMEM grow
    # quadratically in P; this design is for small sequence lengths only.
    # TODO(synk): flash-style per-head loop fallback once H*P gets large.
    assert HP <= 1024, "H*P too large for the block-diagonal head design"

    # Trace-time (free) weight massaging:
    #  * transpose to x @ W form, fold 1/sqrt(head_dim) into Wq and bq
    #  * de-interleave fused kv into contiguous Wk / Wv column blocks whose
    #    '(h d)' head layout matches q's
    #  * concatenate into one (Din, 3D) bf16 weight and one (1, 3D) f32 bias
    wq_t = wq.T * scale                                              # (Din, D)
    wkv_t = wkv.T.reshape(Din, num_heads, 2 * hd)
    wk_t = wkv_t[:, :, :hd].reshape(Din, D)
    wv_t = wkv_t[:, :, hd:].reshape(Din, D)
    w_fused = jnp.concatenate([wq_t, wk_t, wv_t], axis=1).astype(jnp.bfloat16)

    bkv_r = bkv.reshape(num_heads, 2 * hd)
    b_fused = jnp.concatenate(
        [bq * scale, bkv_r[:, :hd].reshape(D), bkv_r[:, hd:].reshape(D)]
    ).reshape(1, 3 * D).astype(jnp.float32)

    # Constant matrices, built once (numpy, host side).
    r = np.arange(HP)[:, None]
    rep_np = (r % P == np.arange(P)[None, :])
    hsel_np = (r // P == np.arange(D)[None, :] // hd)
    seg_np = (r // P == np.arange(HP)[None, :] // P)
    cmask_np = np.where(np.arange(HP)[None, :] % P <= np.arange(P)[:, None],
                        0.0, _NEG_INF)
    rep = jnp.asarray(rep_np, dtype=jnp.bfloat16)       # (HP, P)
    hsel = jnp.asarray(hsel_np, dtype=jnp.bfloat16)     # (HP, D)
    seg = jnp.asarray(seg_np, dtype=jnp.bfloat16)       # (HP, HP)
    cmask = jnp.asarray(cmask_np, dtype=jnp.float32)    # (P, HP)

    kernel = functools.partial(_mha_kernel, num_heads=num_heads,
                               batch_tile=batch_tile)

    TB = batch_tile
    const = lambda b: (0, 0)     # resident constants: block index never changes

    grid_spec = pltpu.PrefetchScalarGridSpec(
        num_scalar_prefetch=0,
        grid=(B // TB,),
        in_specs=[
            pl.BlockSpec((TB, P, Din), lambda b: (b, 0, 0)),   # x
            pl.BlockSpec((Din, 3 * D), const),                 # Wq|Wk|Wv (bf16)
            pl.BlockSpec((1, 3 * D), const),                   # bq|bk|bv (f32)
            pl.BlockSpec((HP, P), const),                      # rep
            pl.BlockSpec((HP, D), const),                      # head selector
            pl.BlockSpec((P, HP), const),                      # causal bias
            pl.BlockSpec((HP, HP), const),                     # segment sums
        ],
        out_specs=[
            pl.BlockSpec((TB, P, D), lambda b: (b, 0, 0)),
            pl.BlockSpec((TB, P, P), lambda b: (b, 0, 0)),
        ],
    )

    return pl.pallas_call(
        kernel,
        out_shape=(jax.ShapeDtypeStruct((B, P, D), x.dtype),       # o
                   jax.ShapeDtypeStruct((B, P, P), jnp.float32)),  # a.mean(heads)
        grid_spec=grid_spec,
        compiler_params=pltpu.CompilerParams(
            dimension_semantics=("parallel",)),
    )(x, w_fused, b_fused, rep, hsel, cmask, seg)


# ---------------------------------------------------------------------------
# Pure-JAX reference (mirrors the PyTorch forward exactly, f32 HIGHEST)
# ---------------------------------------------------------------------------
def reference_forward(x, wq, bq, wkv, bkv, mask, *, num_heads):
    B, P, _ = x.shape
    D = wq.shape[0]
    hd = D // num_heads
    scale = (D / num_heads) ** (-0.5)

    q = x @ wq.T + bq                                   # (B, P, D)
    kv = x @ wkv.T + bkv                                # (B, P, 2D)
    q = q.reshape(B, P, num_heads, hd).transpose(0, 2, 1, 3)
    kv = kv.reshape(B, P, num_heads, 2 * hd).transpose(0, 2, 1, 3)
    k, v = kv[..., :hd], kv[..., hd:]

    a = jnp.einsum('bhpd,bhqd->bhpq', q, k,
                   precision=lax.Precision.HIGHEST) * scale
    a = a + mask
    a = jax.nn.softmax(a, axis=-1)
    o = jnp.einsum('bhpq,bhqd->bphd', a, v,
                   precision=lax.Precision.HIGHEST).reshape(B, P, D)
    return o, a.mean(axis=1)


# ---------------------------------------------------------------------------
# Main
# ---------------------------------------------------------------------------
if __name__ == "__main__":
    # Shapes consistent with the module: dim=32, num_heads=16 (default),
    # seq_len=8, batch=2, temporal=True, stochastic=False, beta=False.
    B, P, DIM, HEADS = 2, 8, 32, 16

    key = jax.random.PRNGKey(0)
    kx, kq, kbq, kkv, kbkv = jax.random.split(key, 5)

    x = jax.random.normal(kx, (B, P, DIM), dtype=jnp.float32)

    # torch.nn.Linear weight layout: (out_features, in_features).
    wq = 0.05 * jax.random.normal(kq, (DIM, DIM), dtype=jnp.float32)
    bq = 0.01 * jax.random.normal(kbq, (DIM,), dtype=jnp.float32)
    wkv = 0.05 * jax.random.normal(kkv, (2 * DIM, DIM), dtype=jnp.float32)
    bkv = 0.01 * jax.random.normal(kbkv, (2 * DIM,), dtype=jnp.float32)

    # TODO(synk): stochastic=True / beta=True branches (torch.rand_like + extra
    # kv_e_proj token) are disabled by default and not implemented here.

    # Grid choice per chip generation:
    #  * single-TensorCore chips (v5e/v6e): collapse to one grid step (TB = B)
    #    to avoid paying the fixed per-step overhead twice;
    #  * dual-TC v7x: keep 2 'parallel' steps so both TensorCores get work.
    dk = jax.devices()[0].device_kind.lower()
    two_tc = ("v7" in dk) or ("7x" in dk)
    bt = max(1, B // 2) if two_tc else B

    o, a_mean = multihead_attention(x, wq, bq, wkv, bkv,
                                    num_heads=HEADS, batch_tile=bt)
    jax.block_until_ready((o, a_mean))

    mask = jnp.triu(jnp.full((P, P), -jnp.inf, dtype=jnp.float32), k=1)
    o_ref, a_ref = reference_forward(x, wq, bq, wkv, bkv, mask, num_heads=HEADS)

    assert o.shape == (B, P, DIM) and a_mean.shape == (B, P, P)
    # The kernel uses bf16 MXU operands (f32 accumulation) and an approximate
    # reciprocal, so compare against the f32 reference with bf16-level slack.
    assert jnp.allclose(o, o_ref, atol=2e-2, rtol=2e-2), "output mismatch"
    assert jnp.allclose(a_mean, a_ref, atol=2e-2, rtol=2e-2), "attn-mean mismatch"

    print("KERNEL_OK")
</pallas_src>

<mosaic_0001>
module attributes {stable_mosaic.version = 11 : i64} {
  func.func @_mha_kernel(%arg0: i32, %arg1: memref<2x8x32xf32, #tpu.memory_space<vmem>>, %arg2: memref<32x96xbf16, #tpu.memory_space<vmem>>, %arg3: memref<1x96xf32, #tpu.memory_space<vmem>>, %arg4: memref<128x8xbf16, #tpu.memory_space<vmem>>, %arg5: memref<128x32xbf16, #tpu.memory_space<vmem>>, %arg6: memref<8x128xf32, #tpu.memory_space<vmem>>, %arg7: memref<128x128xbf16, #tpu.memory_space<vmem>>, %arg8: memref<2x8x32xf32, #tpu.memory_space<vmem>>, %arg9: memref<2x8x8xf32, #tpu.memory_space<vmem>>) attributes {dimension_semantics = [#tpu.dimension_semantics<parallel>], iteration_bounds = array<i64: 1>, scalar_prefetch = 0 : i64, scratch_operands = 0 : i64, tpu.core_type = #tpu.core_type<tc>, window_params = [{transform_indices = @transform_0, window_bounds = array<i64: 2, 8, 32>}, {pipeline_mode = #tpu.pipeline_mode<synchronous>, transform_indices = @transform_1, window_bounds = array<i64: 32, 96>}, {pipeline_mode = #tpu.pipeline_mode<synchronous>, transform_indices = @transform_2, window_bounds = array<i64: 1, 96>}, {pipeline_mode = #tpu.pipeline_mode<synchronous>, transform_indices = @transform_3, window_bounds = array<i64: 128, 8>}, {pipeline_mode = #tpu.pipeline_mode<synchronous>, transform_indices = @transform_4, window_bounds = array<i64: 128, 32>}, {pipeline_mode = #tpu.pipeline_mode<synchronous>, transform_indices = @transform_5, window_bounds = array<i64: 8, 128>}, {pipeline_mode = #tpu.pipeline_mode<synchronous>, transform_indices = @transform_6, window_bounds = array<i64: 128, 128>}, {transform_indices = @transform_7, window_bounds = array<i64: 2, 8, 32>}, {transform_indices = @transform_8, window_bounds = array<i64: 2, 8, 8>}]} {
    %c0 = arith.constant 0 : index
    %c0_0 = arith.constant 0 : index
    %c0_1 = arith.constant 0 : index
    %0 = vector.load %arg1[%c0, %c0_0, %c0_1] : memref<2x8x32xf32, #tpu.memory_space<vmem>>, vector<2x8x32xf32>
    %1 = vector.shape_cast %0 : vector<2x8x32xf32> to vector<16x32xf32>
    %2 = arith.truncf %1 : vector<16x32xf32> to vector<16x32xbf16>
    %c0_2 = arith.constant 0 : index
    %c0_3 = arith.constant 0 : index
    %3 = vector.load %arg2[%c0_2, %c0_3] : memref<32x96xbf16, #tpu.memory_space<vmem>>, vector<32x96xbf16>
    %cst = arith.constant dense<0.000000e+00> : vector<16x96xf32>
    %4 = tpu.matmul %2, %3, %cst {dimension_numbers = #tpu.dot_dimension_numbers<[1], [0], [0], [1], [0, 0, 1, 1], [], []>} : vector<16x32xbf16>, vector<32x96xbf16>, vector<16x96xf32> -> vector<16x96xf32>
    %c0_4 = arith.constant 0 : index
    %c0_5 = arith.constant 0 : index
    %5 = vector.load %arg3[%c0_4, %c0_5] : memref<1x96xf32, #tpu.memory_space<vmem>>, vector<1x96xf32>
    %6 = vector.broadcast %5 : vector<1x96xf32> to vector<16x96xf32>
    %7 = arith.addf %4, %6 : vector<16x96xf32>
    %c0_6 = arith.constant 0 : index
    %c0_7 = arith.constant 0 : index
    %8 = vector.load %arg4[%c0_6, %c0_7] : memref<128x8xbf16, #tpu.memory_space<vmem>>, vector<128x8xbf16>
    %c0_8 = arith.constant 0 : index
    %c0_9 = arith.constant 0 : index
    %9 = vector.load %arg5[%c0_8, %c0_9] : memref<128x32xbf16, #tpu.memory_space<vmem>>, vector<128x32xbf16>
    %c0_10 = arith.constant 0 : index
    %c0_11 = arith.constant 0 : index
    %10 = vector.load %arg6[%c0_10, %c0_11] : memref<8x128xf32, #tpu.memory_space<vmem>>, vector<8x128xf32>
    %c0_12 = arith.constant 0 : index
    %c0_13 = arith.constant 0 : index
    %11 = vector.load %arg7[%c0_12, %c0_13] : memref<128x128xbf16, #tpu.memory_space<vmem>>, vector<128x128xbf16>
    %12 = vector.extract_strided_slice %7 {offsets = [0, 0], sizes = [8, 32], strides = [1, 1]} : vector<16x96xf32> to vector<8x32xf32>
    %13 = arith.truncf %12 : vector<8x32xf32> to vector<8x32xbf16>
    %14 = vector.extract_strided_slice %7 {offsets = [0, 32], sizes = [8, 32], strides = [1, 1]} : vector<16x96xf32> to vector<8x32xf32>
    %15 = arith.truncf %14 : vector<8x32xf32> to vector<8x32xbf16>
    %16 = vector.extract_strided_slice %7 {offsets = [0, 64], sizes = [8, 32], strides = [1, 1]} : vector<16x96xf32> to vector<8x32xf32>
    %17 = arith.truncf %16 : vector<8x32xf32> to vector<8x32xbf16>
    %cst_14 = arith.constant dense<0.000000e+00> : vector<128x32xf32>
    %18 = tpu.matmul %8, %15, %cst_14 {dimension_numbers = #tpu.dot_dimension_numbers<[1], [0], [0], [1], [0, 0, 1, 1], [], []>} : vector<128x8xbf16>, vector<8x32xbf16>, vector<128x32xf32> -> vector<128x32xf32>
    %19 = arith.truncf %18 : vector<128x32xf32> to vector<128x32xbf16>
    %20 = arith.mulf %19, %9 : vector<128x32xbf16>
    %cst_15 = arith.constant dense<0.000000e+00> : vector<128x32xf32>
    %21 = tpu.matmul %8, %17, %cst_15 {dimension_numbers = #tpu.dot_dimension_numbers<[1], [0], [0], [1], [0, 0, 1, 1], [], []>} : vector<128x8xbf16>, vector<8x32xbf16>, vector<128x32xf32> -> vector<128x32xf32>
    %22 = arith.truncf %21 : vector<128x32xf32> to vector<128x32xbf16>
    %23 = arith.mulf %22, %9 : vector<128x32xbf16>
    %cst_16 = arith.constant dense<0.000000e+00> : vector<8x128xf32>
    %24 = tpu.matmul %13, %20, %cst_16 {dimension_numbers = #tpu.dot_dimension_numbers<[1], [1], [0], [0], [0, 0, 1, 0], [], []>} : vector<8x32xbf16>, vector<128x32xbf16>, vector<8x128xf32> -> vector<8x128xf32>
    %25 = arith.addf %24, %10 : vector<8x128xf32>
    %cst_17 = arith.constant dense<0xFF800000> : vector<8xf32>
    %26 = vector.multi_reduction <maximumf>, %25, %cst_17 [1] : vector<8x128xf32> to vector<8xf32>
    %27 = vector.shape_cast %26 : vector<8xf32> to vector<8x1xf32>
    %28 = vector.broadcast %27 : vector<8x1xf32> to vector<8x128xf32>
    %29 = arith.subf %25, %28 : vector<8x128xf32>
    %30 = math.exp %29 : vector<8x128xf32>
    %31 = arith.truncf %30 : vector<8x128xf32> to vector<8x128xbf16>
    %cst_18 = arith.constant dense<0.000000e+00> : vector<8x128xf32>
    %32 = tpu.matmul %31, %11, %cst_18 {dimension_numbers = #tpu.dot_dimension_numbers<[1], [0], [0], [1], [0, 0, 1, 1], [], []>} : vector<8x128xbf16>, vector<128x128xbf16>, vector<8x128xf32> -> vector<8x128xf32>
    %33 = tpu.reciprocal %32 {approx = true} : vector<8x128xf32> -> vector<8x128xf32>
    %34 = arith.mulf %30, %33 : vector<8x128xf32>
    %35 = arith.truncf %34 : vector<8x128xf32> to vector<8x128xbf16>
    %cst_19 = arith.constant dense<0.000000e+00> : vector<8x32xf32>
    %36 = tpu.matmul %35, %23, %cst_19 {dimension_numbers = #tpu.dot_dimension_numbers<[1], [0], [0], [1], [0, 0, 1, 1], [], []>} : vector<8x128xbf16>, vector<128x32xbf16>, vector<8x32xf32> -> vector<8x32xf32>
    %c0_20 = arith.constant 0 : index
    %c0_21 = arith.constant 0 : index
    %c0_22 = arith.constant 0 : index
    %37 = vector.load %arg8[%c0_20, %c0_21, %c0_22] : memref<2x8x32xf32, #tpu.memory_space<vmem>>, vector<1x8x32xf32>
    %38 = vector.shape_cast %37 : vector<1x8x32xf32> to vector<8x32xf32>
    %39 = vector.shape_cast %36 : vector<8x32xf32> to vector<1x8x32xf32>
    tpu.vector_store %arg8[%c0_20, %c0_21, %c0_22], %39 {strides = array<i32>} : memref<2x8x32xf32, #tpu.memory_space<vmem>>, vector<1x8x32xf32>,
    %cst_23 = arith.constant dense<0.000000e+00> : vector<8x8xf32>
    %40 = tpu.matmul %35, %8, %cst_23 {dimension_numbers = #tpu.dot_dimension_numbers<[1], [0], [0], [1], [0, 0, 1, 1], [], []>} : vector<8x128xbf16>, vector<128x8xbf16>, vector<8x8xf32> -> vector<8x8xf32>
    %cst_24 = arith.constant 6.250000e-02 : f32
    %41 = vector.broadcast %cst_24 : f32 to vector<8x8xf32>
    %42 = arith.mulf %40, %41 : vector<8x8xf32>
    %c0_25 = arith.constant 0 : index
    %c0_26 = arith.constant 0 : index
    %c0_27 = arith.constant 0 : index
    %43 = vector.load %arg9[%c0_25, %c0_26, %c0_27] : memref<2x8x8xf32, #tpu.memory_space<vmem>>, vector<1x8x8xf32>
    %44 = vector.shape_cast %43 : vector<1x8x8xf32> to vector<8x8xf32>
    %45 = vector.shape_cast %42 : vector<8x8xf32> to vector<1x8x8xf32>
    tpu.vector_store %arg9[%c0_25, %c0_26, %c0_27], %45 {strides = array<i32>} : memref<2x8x8xf32, #tpu.memory_space<vmem>>, vector<1x8x8xf32>,
    %46 = vector.extract_strided_slice %7 {offsets = [8, 0], sizes = [8, 32], strides = [1, 1]} : vector<16x96xf32> to vector<8x32xf32>
    %47 = arith.truncf %46 : vector<8x32xf32> to vector<8x32xbf16>
    %48 = vector.extract_strided_slice %7 {offsets = [8, 32], sizes = [8, 32], strides = [1, 1]} : vector<16x96xf32> to vector<8x32xf32>
    %49 = arith.truncf %48 : vector<8x32xf32> to vector<8x32xbf16>
    %50 = vector.extract_strided_slice %7 {offsets = [8, 64], sizes = [8, 32], strides = [1, 1]} : vector<16x96xf32> to vector<8x32xf32>
    %51 = arith.truncf %50 : vector<8x32xf32> to vector<8x32xbf16>
    %cst_28 = arith.constant dense<0.000000e+00> : vector<128x32xf32>
    %52 = tpu.matmul %8, %49, %cst_28 {dimension_numbers = #tpu.dot_dimension_numbers<[1], [0], [0], [1], [0, 0, 1, 1], [], []>} : vector<128x8xbf16>, vector<8x32xbf16>, vector<128x32xf32> -> vector<128x32xf32>
    %53 = arith.truncf %52 : vector<128x32xf32> to vector<128x32xbf16>
    %54 = arith.mulf %53, %9 : vector<128x32xbf16>
    %cst_29 = arith.constant dense<0.000000e+00> : vector<128x32xf32>
    %55 = tpu.matmul %8, %51, %cst_29 {dimension_numbers = #tpu.dot_dimension_numbers<[1], [0], [0], [1], [0, 0, 1, 1], [], []>} : vector<128x8xbf16>, vector<8x32xbf16>, vector<128x32xf32> -> vector<128x32xf32>
    %56 = arith.truncf %55 : vector<128x32xf32> to vector<128x32xbf16>
    %57 = arith.mulf %56, %9 : vector<128x32xbf16>
    %cst_30 = arith.constant dense<0.000000e+00> : vector<8x128xf32>
    %58 = tpu.matmul %47, %54, %cst_30 {dimension_numbers = #tpu.dot_dimension_numbers<[1], [1], [0], [0], [0, 0, 1, 0], [], []>} : vector<8x32xbf16>, vector<128x32xbf16>, vector<8x128xf32> -> vector<8x128xf32>
    %59 = arith.addf %58, %10 : vector<8x128xf32>
    %cst_31 = arith.constant dense<0xFF800000> : vector<8xf32>
    %60 = vector.multi_reduction <maximumf>, %59, %cst_31 [1] : vector<8x128xf32> to vector<8xf32>
    %61 = vector.shape_cast %60 : vector<8xf32> to vector<8x1xf32>
    %62 = vector.broadcast %61 : vector<8x1xf32> to vector<8x128xf32>
    %63 = arith.subf %59, %62 : vector<8x128xf32>
    %64 = math.exp %63 : vector<8x128xf32>
    %65 = arith.truncf %64 : vector<8x128xf32> to vector<8x128xbf16>
    %cst_32 = arith.constant dense<0.000000e+00> : vector<8x128xf32>
    %66 = tpu.matmul %65, %11, %cst_32 {dimension_numbers = #tpu.dot_dimension_numbers<[1], [0], [0], [1], [0, 0, 1, 1], [], []>} : vector<8x128xbf16>, vector<128x128xbf16>, vector<8x128xf32> -> vector<8x128xf32>
    %67 = tpu.reciprocal %66 {approx = true} : vector<8x128xf32> -> vector<8x128xf32>
    %68 = arith.mulf %64, %67 : vector<8x128xf32>
    %69 = arith.truncf %68 : vector<8x128xf32> to vector<8x128xbf16>
    %cst_33 = arith.constant dense<0.000000e+00> : vector<8x32xf32>
    %70 = tpu.matmul %69, %57, %cst_33 {dimension_numbers = #tpu.dot_dimension_numbers<[1], [0], [0], [1], [0, 0, 1, 1], [], []>} : vector<8x128xbf16>, vector<128x32xbf16>, vector<8x32xf32> -> vector<8x32xf32>
    %c1 = arith.constant 1 : index
    %c0_34 = arith.constant 0 : index
    %c0_35 = arith.constant 0 : index
    %71 = vector.load %arg8[%c1, %c0_34, %c0_35] : memref<2x8x32xf32, #tpu.memory_space<vmem>>, vector<1x8x32xf32>
    %72 = vector.shape_cast %71 : vector<1x8x32xf32> to vector<8x32xf32>
    %73 = vector.shape_cast %70 : vector<8x32xf32> to vector<1x8x32xf32>
    tpu.vector_store %arg8[%c1, %c0_34, %c0_35], %73 {strides = array<i32>} : memref<2x8x32xf32, #tpu.memory_space<vmem>>, vector<1x8x32xf32>,
    %cst_36 = arith.constant dense<0.000000e+00> : vector<8x8xf32>
    %74 = tpu.matmul %69, %8, %cst_36 {dimension_numbers = #tpu.dot_dimension_numbers<[1], [0], [0], [1], [0, 0, 1, 1], [], []>} : vector<8x128xbf16>, vector<128x8xbf16>, vector<8x8xf32> -> vector<8x8xf32>
    %cst_37 = arith.constant 6.250000e-02 : f32
    %75 = vector.broadcast %cst_37 : f32 to vector<8x8xf32>
    %76 = arith.mulf %74, %75 : vector<8x8xf32>
    %c1_38 = arith.constant 1 : index
    %c0_39 = arith.constant 0 : index
    %c0_40 = arith.constant 0 : index
    %77 = vector.load %arg9[%c1_38, %c0_39, %c0_40] : memref<2x8x8xf32, #tpu.memory_space<vmem>>, vector<1x8x8xf32>
    %78 = vector.shape_cast %77 : vector<1x8x8xf32> to vector<8x8xf32>
    %79 = vector.shape_cast %76 : vector<8x8xf32> to vector<1x8x8xf32>
    tpu.vector_store %arg9[%c1_38, %c0_39, %c0_40], %79 {strides = array<i32>} : memref<2x8x8xf32, #tpu.memory_space<vmem>>, vector<1x8x8xf32>,
    return
  }
  func.func @transform_0(%arg0: i32) -> (i32, i32, i32) {
    %c0_i32 = arith.constant 0 : i32
    %c0_i32_0 = arith.constant 0 : i32
    %c0_i32_1 = arith.constant 0 : i32
    return %arg0, %c0_i32, %c0_i32_0 : i32, i32, i32
  }
  func.func @transform_1(%arg0: i32) -> (i32, i32) {
    %c0_i32 = arith.constant 0 : i32
    %c0_i32_0 = arith.constant 0 : i32
    %c0_i32_1 = arith.constant 0 : i32
    return %c0_i32, %c0_i32_0 : i32, i32
  }
  func.func @transform_2(%arg0: i32) -> (i32, i32) {
    %c0_i32 = arith.constant 0 : i32
    %c0_i32_0 = arith.constant 0 : i32
    %c0_i32_1 = arith.constant 0 : i32
    return %c0_i32, %c0_i32_0 : i32, i32
  }
  func.func @transform_3(%arg0: i32) -> (i32, i32) {
    %c0_i32 = arith.constant 0 : i32
    %c0_i32_0 = arith.constant 0 : i32
    %c0_i32_1 = arith.constant 0 : i32
    return %c0_i32, %c0_i32_0 : i32, i32
  }
  func.func @transform_4(%arg0: i32) -> (i32, i32) {
    %c0_i32 = arith.constant 0 : i32
    %c0_i32_0 = arith.constant 0 : i32
    %c0_i32_1 = arith.constant 0 : i32
    return %c0_i32, %c0_i32_0 : i32, i32
  }
  func.func @transform_5(%arg0: i32) -> (i32, i32) {
    %c0_i32 = arith.constant 0 : i32
    %c0_i32_0 = arith.constant 0 : i32
    %c0_i32_1 = arith.constant 0 : i32
    return %c0_i32, %c0_i32_0 : i32, i32
  }
  func.func @transform_6(%arg0: i32) -> (i32, i32) {
    %c0_i32 = arith.constant 0 : i32
    %c0_i32_0 = arith.constant 0 : i32
    %c0_i32_1 = arith.constant 0 : i32
    return %c0_i32, %c0_i32_0 : i32, i32
  }
  func.func @transform_7(%arg0: i32) -> (i32, i32, i32) {
    %c0_i32 = arith.constant 0 : i32
    %c0_i32_0 = arith.constant 0 : i32
    %c0_i32_1 = arith.constant 0 : i32
    return %arg0, %c0_i32, %c0_i32_0 : i32, i32, i32
  }
  func.func @transform_8(%arg0: i32) -> (i32, i32, i32) {
    %c0_i32 = arith.constant 0 : i32
    %c0_i32_0 = arith.constant 0 : i32
    %c0_i32_1 = arith.constant 0 : i32
    return %arg0, %c0_i32, %c0_i32_0 : i32, i32, i32
  }
}

</mosaic_0001>

<llo_original>
// kernel: tpu_custom_call.1
$region0: #{tpu_custom_call.1}
  #allocation0 [shape = 'u32[]', space=smem, size = 0x4, offset = 0x4, fixed_abs, tag = 'smem constant byte address 0x4 - core index']
  #allocation1 [shape = 'u32[144,128]{1,0:T(1,128)}', space=vmem, size = 0x12000, scoped, tag = 'internal scratch']
  %s0 = inlined_call_operand.vmem [shape: f32[2,8,32], index: 0, kind: input, shape index: {}]
  %s1 = inlined_call_operand.vmem [shape: bf16[32,96], index: 1, kind: input, shape index: {}]
  %s2 = inlined_call_operand.vmem [shape: f32[1,96], index: 2, kind: input, shape index: {}]
  %s3 = inlined_call_operand.vmem [shape: bf16[128,8], index: 3, kind: input, shape index: {}]
  %s4 = inlined_call_operand.vmem [shape: bf16[128,32], index: 4, kind: input, shape index: {}]
  %s5 = inlined_call_operand.vmem [shape: f32[8,128], index: 5, kind: input, shape index: {}]
  %s6 = inlined_call_operand.vmem [shape: bf16[128,128], index: 6, kind: input, shape index: {}]
  %s7 = inlined_call_operand.hbm [shape: f32[2,8,32], index: 7, kind: output, shape index: {0}]
  %s8 = inlined_call_operand.hbm [shape: f32[2,8,8], index: 8, kind: output, shape index: {1}]
  %9 = xla_tuple %s7, %s8
  %s10 = sld [smem:[#allocation0]]
  $region46: #{tpu_custom_call.1} parent=0
    _
  %s12 = ssub.s32 1, %s10
  %s13 = scalar_select 0, %s12, %s10
  $region1: #{tpu_custom_call.1} parent=0
    #allocation2 [shape = 'u8[8192]{0}', space=vmem, size = 0x2000, scoped, tag = 'output window, operand 0, single buffered']
    #allocation3 [shape = 's32[1]{0}', space=sflag, size = 0x4, scoped, tag = 'scoped memory for tpu_custom_call.1']
    #allocation4 [shape = 'u8[8192]{0}', space=vmem, size = 0x2000, scoped, tag = 'output window, operand 1, single buffered']
    #allocation5 [shape = 's32[1]{0}', space=sflag, size = 0x4, scoped, tag = 'scoped memory for tpu_custom_call.1']
    %14 = vsyncpa [#allocation3], 0
    %15 = vsyncpa [#allocation5], 0
    // Predicated region
    $region2: #{tpu_custom_call.1} parent=1 // pred_check
      _
    $region3: #{tpu_custom_call.1} parent=1 // pred_check_branch
      %17 = sbr.rel (0) target = $region5
    $region4: #{tpu_custom_call.1} parent=1 // pred_region
      _
    $region5: #{tpu_custom_call.1} parent=1 // pred_fallthru
      _
    // Predicated region
    $region6: #{tpu_custom_call.1} parent=1 // pred_check
      _
    $region7: #{tpu_custom_call.1} parent=1 // pred_check_branch
      %19 = sbr.rel (0) target = $region9
    $region8: #{tpu_custom_call.1} parent=1 // pred_region
      _
    $region9: #{tpu_custom_call.1} parent=1 // pred_fallthru
      _
    // Predicated region
    $region10: #{tpu_custom_call.1} parent=1 // pred_check
      _
    $region11: #{tpu_custom_call.1} parent=1 // pred_check_branch
      %21 = sbr.rel (0) target = $region13
    $region12: #{tpu_custom_call.1} parent=1 // pred_region
      _
    $region13: #{tpu_custom_call.1} parent=1 // pred_fallthru
      _
    // Predicated region
    $region14: #{tpu_custom_call.1} parent=1 // pred_check
      _
    $region15: #{tpu_custom_call.1} parent=1 // pred_check_branch
      %23 = sbr.rel (0) target = $region17
    $region16: #{tpu_custom_call.1} parent=1 // pred_region
      _
    $region17: #{tpu_custom_call.1} parent=1 // pred_fallthru
      _
    // Predicated region
    $region18: #{tpu_custom_call.1} parent=1 // pred_check
      _
    $region19: #{tpu_custom_call.1} parent=1 // pred_check_branch
      %25 = sbr.rel (0) target = $region21
    $region20: #{tpu_custom_call.1} parent=1 // pred_region
      _
    $region21: #{tpu_custom_call.1} parent=1 // pred_fallthru
      _
    // Predicated region
    $region22: #{tpu_custom_call.1} parent=1 // pred_check
      _
    $region23: #{tpu_custom_call.1} parent=1 // pred_check_branch
      %27 = sbr.rel (0) target = $region25
    $region24: #{tpu_custom_call.1} parent=1 // pred_region
      _
    $region25: #{tpu_custom_call.1} parent=1 // pred_fallthru
      _
    // Predicated region
    $region26: #{tpu_custom_call.1} parent=1 // pred_check
      _
    $region27: #{tpu_custom_call.1} parent=1 // pred_check_branch
      %29 = sbr.rel (0) target = $region29
    $region28: #{tpu_custom_call.1} parent=1 // pred_region
      _
    $region29: #{tpu_custom_call.1} parent=1 // pred_fallthru
      _
    %v31 = vld [vmem:[%s0] sm:$0xff]
    %v32 = vld [vmem:[%s0 + $0x8] sm:$0xff]
    %v33 = vpack.c.bf16 %v32, %v31
    %v34 = vld [vmem:[%s1] sm:$0xf]
    %v35 = vld [vmem:[%s1 + $0x4] sm:$0xf]
    %v36 = vld [vmem:[%s1 + $0x8] sm:$0xf]
    %v37 = vld [vmem:[%s1 + $0xc] sm:$0xf]
    %v38 = vld [vmem:[%s2] sm:$0x1]
    %v40 = vlaneseq
    %v41 = vshrl.u32 %v40, 7
    %v42 = vsub.s32 0, %v41
    %v43 = vrot.slane %v38, %v42
    %v49 = vunpack.c.l.b16 %v34
    %v50 = vunpack.c.l.b16 %v35
    %v51 = vunpack.c.l.b16 %v36
    %v52 = vunpack.c.l.b16 %v37
    %v53 = vpack.c.b16 %v50, %v49
    %v54 = vpack.c.b16 %v52, %v51
    %vm57 = vcmask 261120
    %v59 = vsel %vm57, %v33, 0
    %61 = vmatprep.subr.bf16.mxu0 0
    %62 = vmatpush1.bf16.msra.mxu0 %v53
    %63 = vmatprep.subr.bf16.mxu0 0
    %64 = vmatpush1.bf16.msra.mxu0 %v54
    %65 = vmatprep.subr.bf16.mxu0 0
    %66 = vmatpush1.bf16.msra.mxu0 0
    %67 = vmatprep.subr.bf16.mxu0 0
    %68 = vmatpush1.bf16.msra.mxu0 0
    %69 = vmatprep.subr.bf16.mxu0 0
    %70 = vmatpush1.bf16.msra.mxu0 0
    %71 = vmatprep.subr.bf16.mxu0 0
    %72 = vmatpush1.bf16.msra.mxu0 0
    %73 = vmatprep.subr.bf16.mxu0 0
    %74 = vmatpush1.bf16.msra.mxu0 0
    %75 = vmatprep.subr.bf16.mxu0 0
    %76 = vmatpush1.bf16.msra.mxu0 0
    %77 = vmatprep.subr.bf16.mxu0 0
    %78 = vmatpush1.bf16.msra.mxu0 0
    %79 = vmatprep.subr.bf16.mxu0 0
    %80 = vmatpush1.bf16.msra.mxu0 0
    %81 = vmatprep.subr.bf16.mxu0 0
    %82 = vmatpush1.bf16.msra.mxu0 0
    %83 = vmatprep.subr.bf16.mxu0 0
    %84 = vmatpush1.bf16.msra.mxu0 0
    %85 = vmatprep.subr.bf16.mxu0 0
    %86 = vmatpush1.bf16.msra.mxu0 0
    %87 = vmatprep.subr.bf16.mxu0 0
    %88 = vmatpush1.bf16.msra.mxu0 0
    %89 = vmatprep.subr.bf16.mxu0 0
    %90 = vmatpush1.bf16.msra.mxu0 0
    %91 = vmatprep.subr.bf16.mxu0 0
    %92 = vmatpush1.bf16.msra.mxu0 0
    %93 = vmatprep.mubr.bf16.mxu0 0
    %94 = vmatmul.mubr.bf16.gmra.mrb[0].mxu0 %v59
    %v95 = vpop.f32.mrb[0].mxu0
    %v96 = vadd.f32 %v43, %v95
    %v97 = vpop.f32.mrb[0].mxu0
    %v98 = vpop.f32.mrb[0].mxu0
    %v99 = vadd.f32 %v43, %v98
    %v100 = vpop.f32.mrb[0].mxu0
    %101 = vdwg.mxu0
    %v102 = vld [vmem:[%s3] sm:$0xf]
    %v103 = vld [vmem:[%s3 + $0x4] sm:$0xf]
    %v104 = vld [vmem:[%s3 + $0x8] sm:$0xf]
    %v105 = vld [vmem:[%s3 + $0xc] sm:$0xf]
    %v106 = vld [vmem:[%s3 + $0x10] sm:$0xf]
    %v107 = vld [vmem:[%s3 + $0x14] sm:$0xf]
    %v108 = vld [vmem:[%s3 + $0x18] sm:$0xf]
    %v109 = vld [vmem:[%s3 + $0x1c] sm:$0xf]
    %v110 = vld [vmem:[%s3 + $0x20] sm:$0xf]
    %v111 = vld [vmem:[%s3 + $0x24] sm:$0xf]
    %v112 = vld [vmem:[%s3 + $0x28] sm:$0xf]
    %v113 = vld [vmem:[%s3 + $0x2c] sm:$0xf]
    %v114 = vld [vmem:[%s3 + $0x30] sm:$0xf]
    %v115 = vld [vmem:[%s3 + $0x34] sm:$0xf]
    %v116 = vld [vmem:[%s3 + $0x38] sm:$0xf]
    %v117 = vld [vmem:[%s3 + $0x3c] sm:$0xf]
    %v118 = vld [vmem:[%s4] sm:$0xf]
    %v119 = vld [vmem:[%s4 + $0x4] sm:$0xf]
    %v120 = vld [vmem:[%s4 + $0x8] sm:$0xf]
    %v121 = vld [vmem:[%s4 + $0xc] sm:$0xf]
    %v122 = vld [vmem:[%s4 + $0x10] sm:$0xf]
    %v123 = vld [vmem:[%s4 + $0x14] sm:$0xf]
    %v124 = vld [vmem:[%s4 + $0x18] sm:$0xf]
    %v125 = vld [vmem:[%s4 + $0x1c] sm:$0xf]
    %v126 = vld [vmem:[%s4 + $0x20] sm:$0xf]
    %v127 = vld [vmem:[%s4 + $0x24] sm:$0xf]
    %v128 = vld [vmem:[%s4 + $0x28] sm:$0xf]
    %v129 = vld [vmem:[%s4 + $0x2c] sm:$0xf]
    %v130 = vld [vmem:[%s4 + $0x30] sm:$0xf]
    %v131 = vld [vmem:[%s4 + $0x34] sm:$0xf]
    %v132 = vld [vmem:[%s4 + $0x38] sm:$0xf]
    %v133 = vld [vmem:[%s4 + $0x3c] sm:$0xf]
    %v134 = vld [vmem:[%s5] sm:$0xff]
    %v135 = vld [vmem:[%s6] sm:$0xf]
    %v136 = vld [vmem:[%s6 + $0x4] sm:$0xf]
    %v137 = vld [vmem:[%s6 + $0x8] sm:$0xf]
    %v138 = vld [vmem:[%s6 + $0xc] sm:$0xf]
    %v139 = vld [vmem:[%s6 + $0x10] sm:$0xf]
    %v140 = vld [vmem:[%s6 + $0x14] sm:$0xf]
    %v141 = vld [vmem:[%s6 + $0x18] sm:$0xf]
    %v142 = vld [vmem:[%s6 + $0x1c] sm:$0xf]
    %v143 = vld [vmem:[%s6 + $0x20] sm:$0xf]
    %v144 = vld [vmem:[%s6 + $0x24] sm:$0xf]
    %v145 = vld [vmem:[%s6 + $0x28] sm:$0xf]
    %v146 = vld [vmem:[%s6 + $0x2c] sm:$0xf]
    %v147 = vld [vmem:[%s6 + $0x30] sm:$0xf]
    %v148 = vld [vmem:[%s6 + $0x34] sm:$0xf]
    %v149 = vld [vmem:[%s6 + $0x38] sm:$0xf]
    %v150 = vld [vmem:[%s6 + $0x3c] sm:$0xf]
    %v151 = vpack.c.bf16 %v96, %v96
    %v168 = vunpack.c.l.b16 %v102
    %v169 = vunpack.c.l.b16 %v103
    %v170 = vunpack.c.l.b16 %v104
    %v171 = vunpack.c.l.b16 %v105
    %v172 = vunpack.c.l.b16 %v106
    %v173 = vunpack.c.l.b16 %v107
    %v174 = vunpack.c.l.b16 %v108
    %v175 = vunpack.c.l.b16 %v109
    %v176 = vunpack.c.l.b16 %v110
    %v177 = vunpack.c.l.b16 %v111
    %v178 = vunpack.c.l.b16 %v112
    %v179 = vunpack.c.l.b16 %v113
    %v180 = vunpack.c.l.b16 %v114
    %v181 = vunpack.c.l.b16 %v115
    %v182 = vunpack.c.l.b16 %v116
    %v183 = vunpack.c.l.b16 %v117
    %v184 = vpack.c.b16 %v169, %v168
    %v185 = vpack.c.b16 %v171, %v170
    %v186 = vpack.c.b16 %v173, %v172
    %v187 = vpack.c.b16 %v175, %v174
    %v188 = vpack.c.b16 %v177, %v176
    %v189 = vpack.c.b16 %v179, %v178
    %v190 = vpack.c.b16 %v181, %v180
    %v191 = vpack.c.b16 %v183, %v182
    %193 = vrot.lane.b32.xlu0 %v151, 96
    %v194 = vpop.permute.xlu0 %193
    %vm195 = vcmask 64512
    %v197 = vsel %vm195, %v184, 0
    %v200 = vsel %vm195, %v185, 0
    %v203 = vsel %vm195, %v186, 0
    %v206 = vsel %vm195, %v187, 0
    %v209 = vsel %vm195, %v188, 0
    %v212 = vsel %vm195, %v189, 0
    %v215 = vsel %vm195, %v190, 0
    %v218 = vsel %vm195, %v191, 0
    %vm220 = vcmask 1043456
    %v222 = vsel %vm220, %v194, 0
    %224 = vmatprep.subr.bf16.mxu0 0
    %225 = vmatpush1.bf16.msra.mxu0 %v222
    %226 = vmatprep.subr.bf16.mxu0 0
    %227 = vmatpush1.bf16.msra.mxu0 0
    %228 = vmatprep.subr.bf16.mxu0 0
    %229 = vmatpush1.bf16.msra.mxu0 0
    %230 = vmatprep.subr.bf16.mxu0 0
    %231 = vmatpush1.bf16.msra.mxu0 0
    %232 = vmatprep.subr.bf16.mxu0 0
    %233 = vmatpush1.bf16.msra.mxu0 0
    %234 = vmatprep.subr.bf16.mxu0 0
    %235 = vmatpush1.bf16.msra.mxu0 0
    %236 = vmatprep.subr.bf16.mxu0 0
    %237 = vmatpush1.bf16.msra.mxu0 0
    %238 = vmatprep.subr.bf16.mxu0 0
    %239 = vmatpush1.bf16.msra.mxu0 0
    %240 = vmatprep.subr.bf16.mxu0 0
    %241 = vmatpush1.bf16.msra.mxu0 0
    %242 = vmatprep.subr.bf16.mxu0 0
    %243 = vmatpush1.bf16.msra.mxu0 0
    %244 = vmatprep.subr.bf16.mxu0 0
    %245 = vmatpush1.bf16.msra.mxu0 0
    %246 = vmatprep.subr.bf16.mxu0 0
    %247 = vmatpush1.bf16.msra.mxu0 0
    %248 = vmatprep.subr.bf16.mxu0 0
    %249 = vmatpush1.bf16.msra.mxu0 0
    %250 = vmatprep.subr.bf16.mxu0 0
    %251 = vmatpush1.bf16.msra.mxu0 0
    %252 = vmatprep.subr.bf16.mxu0 0
    %253 = vmatpush1.bf16.msra.mxu0 0
    %254 = vmatprep.subr.bf16.mxu0 0
    %255 = vmatpush1.bf16.msra.mxu0 0
    %256 = vmatprep.mubr.bf16.mxu0 0
    %257 = vmatmul.mubr.bf16.gmra.mrb[0].mxu0 %v197
    %v258 = vpop.f32.mrb[0].mxu0
    %v259 = vadd.f32 0.0, %v258
    %v260 = vpop.f32.mrb[0].mxu0
    %v261 = vpop.f32.mrb[0].mxu0
    %v262 = vadd.f32 0.0, %v261
    %v263 = vpop.f32.mrb[0].mxu0
    %264 = vmatprep.mubr.bf16.mxu0 0
    %265 = vmatmul.mubr.bf16.gmra.mrb[0].mxu0 %v200
    %v266 = vpop.f32.mrb[0].mxu0
    %v267 = vadd.f32 0.0, %v266
    %v268 = vpop.f32.mrb[0].mxu0
    %v269 = vpop.f32.mrb[0].mxu0
    %v270 = vadd.f32 0.0, %v269
    %v271 = vpop.f32.mrb[0].mxu0
    %272 = vmatprep.mubr.bf16.mxu0 0
    %273 = vmatmul.mubr.bf16.gmra.mrb[0].mxu0 %v203
    %v274 = vpop.f32.mrb[0].mxu0
    %v275 = vadd.f32 0.0, %v274
    %v276 = vpop.f32.mrb[0].mxu0
    %v277 = vpop.f32.mrb[0].mxu0
    %v278 = vadd.f32 0.0, %v277
    %v279 = vpop.f32.mrb[0].mxu0
    %280 = vmatprep.mubr.bf16.mxu0 0
    %281 = vmatmul.mubr.bf16.gmra.mrb[0].mxu0 %v206
    %v282 = vpop.f32.mrb[0].mxu0
    %v283 = vadd.f32 0.0, %v282
    %v284 = vpop.f32.mrb[0].mxu0
    %v285 = vpop.f32.mrb[0].mxu0
    %v286 = vadd.f32 0.0, %v285
    %v287 = vpop.f32.mrb[0].mxu0
    %288 = vmatprep.mubr.bf16.mxu0 0
    %289 = vmatmul.mubr.bf16.gmra.mrb[0].mxu0 %v209
    %v290 = vpop.f32.mrb[0].mxu0
    %v291 = vadd.f32 0.0, %v290
    %v292 = vpop.f32.mrb[0].mxu0
    %v293 = vpop.f32.mrb[0].mxu0
    %v294 = vadd.f32 0.0, %v293
    %v295 = vpop.f32.mrb[0].mxu0
    %296 = vmatprep.mubr.bf16.mxu0 0
    %297 = vmatmul.mubr.bf16.gmra.mrb[0].mxu0 %v212
    %v298 = vpop.f32.mrb[0].mxu0
    %v299 = vadd.f32 0.0, %v298
    %v300 = vpop.f32.mrb[0].mxu0
    %v301 = vpop.f32.mrb[0].mxu0
    %v302 = vadd.f32 0.0, %v301
    %v303 = vpop.f32.mrb[0].mxu0
    %304 = vmatprep.mubr.bf16.mxu0 0
    %305 = vmatmul.mubr.bf16.gmra.mrb[0].mxu0 %v215
    %v306 = vpop.f32.mrb[0].mxu0
    %v307 = vadd.f32 0.0, %v306
    %v308 = vpop.f32.mrb[0].mxu0
    %v309 = vpop.f32.mrb[0].mxu0
    %v310 = vadd.f32 0.0, %v309
    %v311 = vpop.f32.mrb[0].mxu0
    %312 = vmatprep.mubr.bf16.mxu0 0
    %313 = vmatmul.mubr.bf16.gmra.mrb[0].mxu0 %v218
    %v314 = vpop.f32.mrb[0].mxu0
    %v315 = vadd.f32 0.0, %v314
    %v316 = vpop.f32.mrb[0].mxu0
    %v317 = vpop.f32.mrb[0].mxu0
    %v318 = vadd.f32 0.0, %v317
    %v319 = vpop.f32.mrb[0].mxu0
    %320 = vdwg.mxu0
    %v321 = vpack.c.bf16 %v262, %v259
    %v322 = vpack.c.bf16 %v270, %v267
    %v323 = vpack.c.bf16 %v278, %v275
    %v324 = vpack.c.bf16 %v286, %v283
    %v325 = vpack.c.bf16 %v294, %v291
    %v326 = vpack.c.bf16 %v302, %v299
    %v327 = vpack.c.bf16 %v310, %v307
    %v328 = vpack.c.bf16 %v318, %v315
    %v345 = vunpack.c.l.b16 %v118
    %v346 = vunpack.c.l.b16 %v119
    %v347 = vunpack.c.l.b16 %v120
    %v348 = vunpack.c.l.b16 %v121
    %v349 = vunpack.c.l.b16 %v122
    %v350 = vunpack.c.l.b16 %v123
    %v351 = vunpack.c.l.b16 %v124
    %v352 = vunpack.c.l.b16 %v125
    %v353 = vunpack.c.l.b16 %v126
    %v354 = vunpack.c.l.b16 %v127
    %v355 = vunpack.c.l.b16 %v128
    %v356 = vunpack.c.l.b16 %v129
    %v357 = vunpack.c.l.b16 %v130
    %v358 = vunpack.c.l.b16 %v131
    %v359 = vunpack.c.l.b16 %v132
    %v360 = vunpack.c.l.b16 %v133
    %v361 = vpack.c.b16 %v346, %v345
    %v362 = vpack.c.b16 %v348, %v347
    %v363 = vpack.c.b16 %v350, %v349
    %v364 = vpack.c.b16 %v352, %v351
    %v365 = vpack.c.b16 %v354, %v353
    %v366 = vpack.c.b16 %v356, %v355
    %v367 = vpack.c.b16 %v358, %v357
    %v368 = vpack.c.b16 %v360, %v359
    %v377 = vmul.bf16 %v321, %v361
    %v378 = vmul.bf16 %v322, %v362
    %v379 = vmul.bf16 %v323, %v363
    %v380 = vmul.bf16 %v324, %v364
    %v381 = vmul.bf16 %v325, %v365
    %v382 = vmul.bf16 %v326, %v366
    %v383 = vmul.bf16 %v327, %v367
    %v384 = vmul.bf16 %v328, %v368
    %385 = vrot.lane.b32.xlu0 %v151, 64
    %v386 = vpop.permute.xlu0 %385
    %v388 = vsel %vm220, %v386, 0
    %390 = vmatprep.subr.bf16.mxu0 0
    %391 = vmatpush1.bf16.msra.mxu0 %v388
    %392 = vmatprep.subr.bf16.mxu0 0
    %393 = vmatpush1.bf16.msra.mxu0 0
    %394 = vmatprep.subr.bf16.mxu0 0
    %395 = vmatpush1.bf16.msra.mxu0 0
    %396 = vmatprep.subr.bf16.mxu0 0
    %397 = vmatpush1.bf16.msra.mxu0 0
    %398 = vmatprep.subr.bf16.mxu0 0
    %399 = vmatpush1.bf16.msra.mxu0 0
    %400 = vmatprep.subr.bf16.mxu0 0
    %401 = vmatpush1.bf16.msra.mxu0 0
    %402 = vmatprep.subr.bf16.mxu0 0
    %403 = vmatpush1.bf16.msra.mxu0 0
    %404 = vmatprep.subr.bf16.mxu0 0
    %405 = vmatpush1.bf16.msra.mxu0 0
    %406 = vmatprep.subr.bf16.mxu0 0
    %407 = vmatpush1.bf16.msra.mxu0 0
    %408 = vmatprep.subr.bf16.mxu0 0
    %409 = vmatpush1.bf16.msra.mxu0 0
    %410 = vmatprep.subr.bf16.mxu0 0
    %411 = vmatpush1.bf16.msra.mxu0 0
    %412 = vmatprep.subr.bf16.mxu0 0
    %413 = vmatpush1.bf16.msra.mxu0 0
    %414 = vmatprep.subr.bf16.mxu0 0
    %415 = vmatpush1.bf16.msra.mxu0 0
    %416 = vmatprep.subr.bf16.mxu0 0
    %417 = vmatpush1.bf16.msra.mxu0 0
    %418 = vmatprep.subr.bf16.mxu0 0
    %419 = vmatpush1.bf16.msra.mxu0 0
    %420 = vmatprep.subr.bf16.mxu0 0
    %421 = vmatpush1.bf16.msra.mxu0 0
    %422 = vmatprep.mubr.bf16.mxu0 0
    %423 = vmatmul.mubr.bf16.gmra.mrb[0].mxu0 %v197
    %v424 = vpop.f32.mrb[0].mxu0
    %v425 = vadd.f32 0.0, %v424
    %v426 = vpop.f32.mrb[0].mxu0
    %v427 = vpop.f32.mrb[0].mxu0
    %v428 = vadd.f32 0.0, %v427
    %v429 = vpop.f32.mrb[0].mxu0
    %430 = vmatprep.mubr.bf16.mxu0 0
    %431 = vmatmul.mubr.bf16.gmra.mrb[0].mxu0 %v200
    %v432 = vpop.f32.mrb[0].mxu0
    %v433 = vadd.f32 0.0, %v432
    %v434 = vpop.f32.mrb[0].mxu0
    %v435 = vpop.f32.mrb[0].mxu0
    %v436 = vadd.f32 0.0, %v435
    %v437 = vpop.f32.mrb[0].mxu0
    %438 = vmatprep.mubr.bf16.mxu0 0
    %439 = vmatmul.mubr.bf16.gmra.mrb[0].mxu0 %v203
    %v440 = vpop.f32.mrb[0].mxu0
    %v441 = vadd.f32 0.0, %v440
    %v442 = vpop.f32.mrb[0].mxu0
    %v443 = vpop.f32.mrb[0].mxu0
    %v444 = vadd.f32 0.0, %v443
    %v445 = vpop.f32.mrb[0].mxu0
    %446 = vmatprep.mubr.bf16.mxu0 0
    %447 = vmatmul.mubr.bf16.gmra.mrb[0].mxu0 %v206
    %v448 = vpop.f32.mrb[0].mxu0
    %v449 = vadd.f32 0.0, %v448
    %v450 = vpop.f32.mrb[0].mxu0
    %v451 = vpop.f32.mrb[0].mxu0
    %v452 = vadd.f32 0.0, %v451
    %v453 = vpop.f32.mrb[0].mxu0
    %454 = vmatprep.mubr.bf16.mxu0 0
    %455 = vmatmul.mubr.bf16.gmra.mrb[0].mxu0 %v209
    %v456 = vpop.f32.mrb[0].mxu0
    %v457 = vadd.f32 0.0, %v456
    %v458 = vpop.f32.mrb[0].mxu0
    %v459 = vpop.f32.mrb[0].mxu0
    %v460 = vadd.f32 0.0, %v459
    %v461 = vpop.f32.mrb[0].mxu0
    %462 = vmatprep.mubr.bf16.mxu0 0
    %463 = vmatmul.mubr.bf16.gmra.mrb[0].mxu0 %v212
    %v464 = vpop.f32.mrb[0].mxu0
    %v465 = vadd.f32 0.0, %v464
    %v466 = vpop.f32.mrb[0].mxu0
    %v467 = vpop.f32.mrb[0].mxu0
    %v468 = vadd.f32 0.0, %v467
    %v469 = vpop.f32.mrb[0].mxu0
    %470 = vmatprep.mubr.bf16.mxu0 0
    %471 = vmatmul.mubr.bf16.gmra.mrb[0].mxu0 %v215
    %v472 = vpop.f32.mrb[0].mxu0
    %v473 = vadd.f32 0.0, %v472
    %v474 = vpop.f32.mrb[0].mxu0
    %v475 = vpop.f32.mrb[0].mxu0
    %v476 = vadd.f32 0.0, %v475
    %v477 = vpop.f32.mrb[0].mxu0
    %478 = vmatprep.mubr.bf16.mxu0 0
    %479 = vmatmul.mubr.bf16.gmra.mrb[0].mxu0 %v218
    %v480 = vpop.f32.mrb[0].mxu0
    %v481 = vadd.f32 0.0, %v480
    %v482 = vpop.f32.mrb[0].mxu0
    %v483 = vpop.f32.mrb[0].mxu0
    %v484 = vadd.f32 0.0, %v483
    %v485 = vpop.f32.mrb[0].mxu0
    %486 = vdwg.mxu0
    %v487 = vpack.c.bf16 %v428, %v425
    %v488 = vpack.c.bf16 %v436, %v433
    %v489 = vpack.c.bf16 %v444, %v441
    %v490 = vpack.c.bf16 %v452, %v449
    %v491 = vpack.c.bf16 %v460, %v457
    %v492 = vpack.c.bf16 %v468, %v465
    %v493 = vpack.c.bf16 %v476, %v473
    %v494 = vpack.c.bf16 %v484, %v481
    %v495 = vmul.bf16 %v487, %v361
    %v496 = vmul.bf16 %v488, %v362
    %v497 = vmul.bf16 %v489, %v363
    %v498 = vmul.bf16 %v490, %v364
    %v499 = vmul.bf16 %v491, %v365
    %v500 = vmul.bf16 %v492, %v366
    %v501 = vmul.bf16 %v493, %v367
    %v502 = vmul.bf16 %v494, %v368
    %v504 = vsel %vm57, %v151, 0
    %v507 = vsel %vm57, %v377, 0
    %v510 = vsel %vm57, %v378, 0
    %v513 = vsel %vm57, %v379, 0
    %v516 = vsel %vm57, %v380, 0
    %v519 = vsel %vm57, %v381, 0
    %v522 = vsel %vm57, %v382, 0
    %v525 = vsel %vm57, %v383, 0
    %v528 = vsel %vm57, %v384, 0
    %530 = vmatprep.subr.bf16.mxu0 0
    %531 = vmatpush1.bf16.xpose.msra.mxu0 %v507
    %532 = vmatprep.subr.bf16.mxu0 0
    %533 = vmatpush1.bf16.xpose.msra.mxu0 %v510
    %534 = vmatprep.subr.bf16.mxu0 0
    %535 = vmatpush1.bf16.xpose.msra.mxu0 %v513
    %536 = vmatprep.subr.bf16.mxu0 0
    %537 = vmatpush1.bf16.xpose.msra.mxu0 %v516
    %538 = vmatprep.subr.bf16.mxu0 0
    %539 = vmatpush1.bf16.xpose.msra.mxu0 %v519
    %540 = vmatprep.subr.bf16.mxu0 0
    %541 = vmatpush1.bf16.xpose.msra.mxu0 %v522
    %542 = vmatprep.subr.bf16.mxu0 0
    %543 = vmatpush1.bf16.xpose.msra.mxu0 %v525
    %544 = vmatprep.subr.bf16.mxu0 0
    %545 = vmatpush1.bf16.xpose.msra.mxu0 %v528
    %546 = vmatprep.subr.bf16.mxu0 0
    %547 = vmatpush1.bf16.xpose.msra.mxu0 0
    %548 = vmatprep.subr.bf16.mxu0 0
    %549 = vmatpush1.bf16.xpose.msra.mxu0 0
    %550 = vmatprep.subr.bf16.mxu0 0
    %551 = vmatpush1.bf16.xpose.msra.mxu0 0
    %552 = vmatprep.subr.bf16.mxu0 0
    %553 = vmatpush1.bf16.xpose.msra.mxu0 0
    %554 = vmatprep.subr.bf16.mxu0 0
    %555 = vmatpush1.bf16.xpose.msra.mxu0 0
    %556 = vmatprep.subr.bf16.mxu0 0
    %557 = vmatpush1.bf16.xpose.msra.mxu0 0
    %558 = vmatprep.subr.bf16.mxu0 0
    %559 = vmatpush1.bf16.xpose.msra.mxu0 0
    %560 = vmatprep.subr.bf16.mxu0 0
    %561 = vmatpush1.bf16.xpose.msra.mxu0 0
    %562 = vmatprep.mubr.bf16.mxu0 0
    %563 = vmatmul.mubr.bf16.gmra.mrb[0].mxu0 %v504
    %v564 = vpop.f32.mrb[0].mxu0
    %v565 = vadd.f32 %v134, %v564
    %v566 = vpop.f32.mrb[0].mxu0
    %v567 = vpop.f32.mrb[0].mxu0
    %v568 = vpop.f32.mrb[0].mxu0
    %569 = vdwg.mxu0
    %570 = vmax.xlane.f32.xlu0 %v565
    %v571 = vpop.xlane.xlu0 %570
    %v572 = vsub.f32 %v565, %v571
    %v573 = vmul.f32 %v572, 1.442695
    %v574 = vpow.pop %v573
    %v575 = vpack.c.bf16 %v574, %v574
    %v592 = vunpack.c.l.b16 %v135
    %v593 = vunpack.c.l.b16 %v136
    %v594 = vunpack.c.l.b16 %v137
    %v595 = vunpack.c.l.b16 %v138
    %v596 = vunpack.c.l.b16 %v139
    %v597 = vunpack.c.l.b16 %v140
    %v598 = vunpack.c.l.b16 %v141
    %v599 = vunpack.c.l.b16 %v142
    %v600 = vunpack.c.l.b16 %v143
    %v601 = vunpack.c.l.b16 %v144
    %v602 = vunpack.c.l.b16 %v145
    %v603 = vunpack.c.l.b16 %v146
    %v604 = vunpack.c.l.b16 %v147
    %v605 = vunpack.c.l.b16 %v148
    %v606 = vunpack.c.l.b16 %v149
    %v607 = vunpack.c.l.b16 %v150
    %v608 = vpack.c.b16 %v593, %v592
    %v609 = vpack.c.b16 %v595, %v594
    %v610 = vpack.c.b16 %v597, %v596
    %v611 = vpack.c.b16 %v599, %v598
    %v612 = vpack.c.b16 %v601, %v600
    %v613 = vpack.c.b16 %v603, %v602
    %v614 = vpack.c.b16 %v605, %v604
    %v615 = vpack.c.b16 %v607, %v606
    %624 = vmatprep.subr.bf16.mxu0 0
    %625 = vmatpush1.bf16.msra.mxu0 %v608
    %626 = vmatprep.subr.bf16.mxu0 0
    %627 = vmatpush1.bf16.msra.mxu0 %v609
    %628 = vmatprep.subr.bf16.mxu0 0
    %629 = vmatpush1.bf16.msra.mxu0 %v610
    %630 = vmatprep.subr.bf16.mxu0 0
    %631 = vmatpush1.bf16.msra.mxu0 %v611
    %632 = vmatprep.subr.bf16.mxu0 0
    %633 = vmatpush1.bf16.msra.mxu0 %v612
    %634 = vmatprep.subr.bf16.mxu0 0
    %635 = vmatpush1.bf16.msra.mxu0 %v613
    %636 = vmatprep.subr.bf16.mxu0 0
    %637 = vmatpush1.bf16.msra.mxu0 %v614
    %638 = vmatprep.subr.bf16.mxu0 0
    %639 = vmatpush1.bf16.msra.mxu0 %v615
    %640 = vmatprep.subr.bf16.mxu0 0
    %641 = vmatpush1.bf16.msra.mxu0 0
    %642 = vmatprep.subr.bf16.mxu0 0
    %643 = vmatpush1.bf16.msra.mxu0 0
    %644 = vmatprep.subr.bf16.mxu0 0
    %645 = vmatpush1.bf16.msra.mxu0 0
    %646 = vmatprep.subr.bf16.mxu0 0
    %647 = vmatpush1.bf16.msra.mxu0 0
    %648 = vmatprep.subr.bf16.mxu0 0
    %649 = vmatpush1.bf16.msra.mxu0 0
    %650 = vmatprep.subr.bf16.mxu0 0
    %651 = vmatpush1.bf16.msra.mxu0 0
    %652 = vmatprep.subr.bf16.mxu0 0
    %653 = vmatpush1.bf16.msra.mxu0 0
    %654 = vmatprep.subr.bf16.mxu0 0
    %655 = vmatpush1.bf16.msra.mxu0 0
    %656 = vmatprep.mubr.bf16.mxu0 0
    %657 = vmatmul.mubr.bf16.gmra.mrb[0].mxu0 %v575
    %v658 = vpop.f32.mrb[0].mxu0
    %v659 = vadd.f32 0.0, %v658
    %v660 = vpop.f32.mrb[0].mxu0
    %v661 = vpop.f32.mrb[0].mxu0
    %v662 = vpop.f32.mrb[0].mxu0
    %663 = vdwg.mxu0
    %v664 = vrcp.pop %v659
    %v665 = vmul.f32 %v574, %v664
    %v666 = vpack.c.bf16 %v665, %v665
    %667 = vmatprep.subr.bf16.mxu0 0
    %668 = vmatpush1.bf16.msra.mxu0 %v495
    %669 = vmatprep.subr.bf16.mxu0 0
    %670 = vmatpush1.bf16.msra.mxu0 %v496
    %671 = vmatprep.subr.bf16.mxu0 0
    %672 = vmatpush1.bf16.msra.mxu0 %v497
    %673 = vmatprep.subr.bf16.mxu0 0
    %674 = vmatpush1.bf16.msra.mxu0 %v498
    %675 = vmatprep.subr.bf16.mxu0 0
    %676 = vmatpush1.bf16.msra.mxu0 %v499
    %677 = vmatprep.subr.bf16.mxu0 0
    %678 = vmatpush1.bf16.msra.mxu0 %v500
    %679 = vmatprep.subr.bf16.mxu0 0
    %680 = vmatpush1.bf16.msra.mxu0 %v501
    %681 = vmatprep.subr.bf16.mxu0 0
    %682 = vmatpush1.bf16.msra.mxu0 %v502
    %683 = vmatprep.subr.bf16.mxu0 0
    %684 = vmatpush1.bf16.msra.mxu0 0
    %685 = vmatprep.subr.bf16.mxu0 0
    %686 = vmatpush1.bf16.msra.mxu0 0
    %687 = vmatprep.subr.bf16.mxu0 0
    %688 = vmatpush1.bf16.msra.mxu0 0
    %689 = vmatprep.subr.bf16.mxu0 0
    %690 = vmatpush1.bf16.msra.mxu0 0
    %691 = vmatprep.subr.bf16.mxu0 0
    %692 = vmatpush1.bf16.msra.mxu0 0
    %693 = vmatprep.subr.bf16.mxu0 0
    %694 = vmatpush1.bf16.msra.mxu0 0
    %695 = vmatprep.subr.bf16.mxu0 0
    %696 = vmatpush1.bf16.msra.mxu0 0
    %697 = vmatprep.subr.bf16.mxu0 0
    %698 = vmatpush1.bf16.msra.mxu0 0
    %699 = vmatprep.mubr.bf16.mxu0 0
    %700 = vmatmul.mubr.bf16.gmra.mrb[0].mxu0 %v666
    %v701 = vpop.f32.mrb[0].mxu0
    %v702 = vadd.f32 0.0, %v701
    %v703 = vpop.f32.mrb[0].mxu0
    %v704 = vpop.f32.mrb[0].mxu0
    %v705 = vpop.f32.mrb[0].mxu0
    %706 = vdwg.mxu0
    %707 = vst.msk [vmem:[#allocation2] sm:$0xff] %vm57, %v702
    %716 = vmatprep.subr.bf16.mxu0 0
    %717 = vmatpush1.bf16.msra.mxu0 %v184
    %718 = vmatprep.subr.bf16.mxu0 0
    %719 = vmatpush1.bf16.msra.mxu0 %v185
    %720 = vmatprep.subr.bf16.mxu0 0
    %721 = vmatpush1.bf16.msra.mxu0 %v186
    %722 = vmatprep.subr.bf16.mxu0 0
    %723 = vmatpush1.bf16.msra.mxu0 %v187
    %724 = vmatprep.subr.bf16.mxu0 0
    %725 = vmatpush1.bf16.msra.mxu0 %v188
    %726 = vmatprep.subr.bf16.mxu0 0
    %727 = vmatpush1.bf16.msra.mxu0 %v189
    %728 = vmatprep.subr.bf16.mxu0 0
    %729 = vmatpush1.bf16.msra.mxu0 %v190
    %730 = vmatprep.subr.bf16.mxu0 0
    %731 = vmatpush1.bf16.msra.mxu0 %v191
    %732 = vmatprep.subr.bf16.mxu0 0
    %733 = vmatpush1.bf16.msra.mxu0 0
    %734 = vmatprep.subr.bf16.mxu0 0
    %735 = vmatpush1.bf16.msra.mxu0 0
    %736 = vmatprep.subr.bf16.mxu0 0
    %737 = vmatpush1.bf16.msra.mxu0 0
    %738 = vmatprep.subr.bf16.mxu0 0
    %739 = vmatpush1.bf16.msra.mxu0 0
    %740 = vmatprep.subr.bf16.mxu0 0
    %741 = vmatpush1.bf16.msra.mxu0 0
    %742 = vmatprep.subr.bf16.mxu0 0
    %743 = vmatpush1.bf16.msra.mxu0 0
    %744 = vmatprep.subr.bf16.mxu0 0
    %745 = vmatpush1.bf16.msra.mxu0 0
    %746 = vmatprep.subr.bf16.mxu0 0
    %747 = vmatpush1.bf16.msra.mxu0 0
    %748 = vmatprep.mubr.bf16.mxu0 0
    %749 = vmatmul.mubr.bf16.gmra.mrb[0].mxu0 %v666
    %v750 = vpop.f32.mrb[0].mxu0
    %v751 = vadd.f32 0.0, %v750
    %v752 = vpop.f32.mrb[0].mxu0
    %v753 = vpop.f32.mrb[0].mxu0
    %v754 = vpop.f32.mrb[0].mxu0
    %755 = vdwg.mxu0
    %v756 = vmul.f32 %v751, 0.0625
    %757 = vst.msk [vmem:[#allocation4] sm:$0xff] %vm195, %v756
    %v758 = vpack.c.bf16 %v99, %v99
    %760 = vrot.lane.b32.xlu0 %v758, 96
    %v761 = vpop.permute.xlu0 %760
    %v763 = vsel %vm220, %v761, 0
    %765 = vmatprep.subr.bf16.mxu0 0
    %766 = vmatpush1.bf16.msra.mxu0 %v763
    %767 = vmatprep.subr.bf16.mxu0 0
    %768 = vmatpush1.bf16.msra.mxu0 0
    %769 = vmatprep.subr.bf16.mxu0 0
    %770 = vmatpush1.bf16.msra.mxu0 0
    %771 = vmatprep.subr.bf16.mxu0 0
    %772 = vmatpush1.bf16.msra.mxu0 0
    %773 = vmatprep.subr.bf16.mxu0 0
    %774 = vmatpush1.bf16.msra.mxu0 0
    %775 = vmatprep.subr.bf16.mxu0 0
    %776 = vmatpush1.bf16.msra.mxu0 0
    %777 = vmatprep.subr.bf16.mxu0 0
    %778 = vmatpush1.bf16.msra.mxu0 0
    %779 = vmatprep.subr.bf16.mxu0 0
    %780 = vmatpush1.bf16.msra.mxu0 0
    %781 = vmatprep.subr.bf16.mxu0 0
    %782 = vmatpush1.bf16.msra.mxu0 0
    %783 = vmatprep.subr.bf16.mxu0 0
    %784 = vmatpush1.bf16.msra.mxu0 0
    %785 = vmatprep.subr.bf16.mxu0 0
    %786 = vmatpush1.bf16.msra.mxu0 0
    %787 = vmatprep.subr.bf16.mxu0 0
    %788 = vmatpush1.bf16.msra.mxu0 0
    %789 = vmatprep.subr.bf16.mxu0 0
    %790 = vmatpush1.bf16.msra.mxu0 0
    %791 = vmatprep.subr.bf16.mxu0 0
    %792 = vmatpush1.bf16.msra.mxu0 0
    %793 = vmatprep.subr.bf16.mxu0 0
    %794 = vmatpush1.bf16.msra.mxu0 0
    %795 = vmatprep.subr.bf16.mxu0 0
    %796 = vmatpush1.bf16.msra.mxu0 0
    %797 = vmatprep.mubr.bf16.mxu0 0
    %798 = vmatmul.mubr.bf16.gmra.mrb[0].mxu0 %v197
    %v799 = vpop.f32.mrb[0].mxu0
    %v800 = vadd.f32 0.0, %v799
    %v801 = vpop.f32.mrb[0].mxu0
    %v802 = vpop.f32.mrb[0].mxu0
    %v803 = vadd.f32 0.0, %v802
    %v804 = vpop.f32.mrb[0].mxu0
    %805 = vmatprep.mubr.bf16.mxu0 0
    %806 = vmatmul.mubr.bf16.gmra.mrb[0].mxu0 %v200
    %v807 = vpop.f32.mrb[0].mxu0
    %v808 = vadd.f32 0.0, %v807
    %v809 = vpop.f32.mrb[0].mxu0
    %v810 = vpop.f32.mrb[0].mxu0
    %v811 = vadd.f32 0.0, %v810
    %v812 = vpop.f32.mrb[0].mxu0
    %813 = vmatprep.mubr.bf16.mxu0 0
    %814 = vmatmul.mubr.bf16.gmra.mrb[0].mxu0 %v203
    %v815 = vpop.f32.mrb[0].mxu0
    %v816 = vadd.f32 0.0, %v815
    %v817 = vpop.f32.mrb[0].mxu0
    %v818 = vpop.f32.mrb[0].mxu0
    %v819 = vadd.f32 0.0, %v818
    %v820 = vpop.f32.mrb[0].mxu0
    %821 = vmatprep.mubr.bf16.mxu0 0
    %822 = vmatmul.mubr.bf16.gmra.mrb[0].mxu0 %v206
    %v823 = vpop.f32.mrb[0].mxu0
    %v824 = vadd.f32 0.0, %v823
    %v825 = vpop.f32.mrb[0].mxu0
    %v826 = vpop.f32.mrb[0].mxu0
    %v827 = vadd.f32 0.0, %v826
    %v828 = vpop.f32.mrb[0].mxu0
    %829 = vmatprep.mubr.bf16.mxu0 0
    %830 = vmatmul.mubr.bf16.gmra.mrb[0].mxu0 %v209
    %v831 = vpop.f32.mrb[0].mxu0
    %v832 = vadd.f32 0.0, %v831
    %v833 = vpop.f32.mrb[0].mxu0
    %v834 = vpop.f32.mrb[0].mxu0
    %v835 = vadd.f32 0.0, %v834
    %v836 = vpop.f32.mrb[0].mxu0
    %837 = vmatprep.mubr.bf16.mxu0 0
    %838 = vmatmul.mubr.bf16.gmra.mrb[0].mxu0 %v212
    %v839 = vpop.f32.mrb[0].mxu0
    %v840 = vadd.f32 0.0, %v839
    %v841 = vpop.f32.mrb[0].mxu0
    %v842 = vpop.f32.mrb[0].mxu0
    %v843 = vadd.f32 0.0, %v842
    %v844 = vpop.f32.mrb[0].mxu0
    %845 = vmatprep.mubr.bf16.mxu0 0
    %846 = vmatmul.mubr.bf16.gmra.mrb[0].mxu0 %v215
    %v847 = vpop.f32.mrb[0].mxu0
    %v848 = vadd.f32 0.0, %v847
    %v849 = vpop.f32.mrb[0].mxu0
    %v850 = vpop.f32.mrb[0].mxu0
    %v851 = vadd.f32 0.0, %v850
    %v852 = vpop.f32.mrb[0].mxu0
    %853 = vmatprep.mubr.bf16.mxu0 0
    %854 = vmatmul.mubr.bf16.gmra.mrb[0].mxu0 %v218
    %v855 = vpop.f32.mrb[0].mxu0
    %v856 = vadd.f32 0.0, %v855
    %v857 = vpop.f32.mrb[0].mxu0
    %v858 = vpop.f32.mrb[0].mxu0
    %v859 = vadd.f32 0.0, %v858
    %v860 = vpop.f32.mrb[0].mxu0
    %861 = vdwg.mxu0
    %v862 = vpack.c.bf16 %v803, %v800
    %v863 = vpack.c.bf16 %v811, %v808
    %v864 = vpack.c.bf16 %v819, %v816
    %v865 = vpack.c.bf16 %v827, %v824
    %v866 = vpack.c.bf16 %v835, %v832
    %v867 = vpack.c.bf16 %v843, %v840
    %v868 = vpack.c.bf16 %v851, %v848
    %v869 = vpack.c.bf16 %v859, %v856
    %v870 = vmul.bf16 %v862, %v361
    %v871 = vmul.bf16 %v863, %v362
    %v872 = vmul.bf16 %v864, %v363
    %v873 = vmul.bf16 %v865, %v364
    %v874 = vmul.bf16 %v866, %v365
    %v875 = vmul.bf16 %v867, %v366
    %v876 = vmul.bf16 %v868, %v367
    %v877 = vmul.bf16 %v869, %v368
    %878 = vrot.lane.b32.xlu0 %v758, 64
    %v879 = vpop.permute.xlu0 %878
    %v881 = vsel %vm220, %v879, 0
    %883 = vmatprep.subr.bf16.mxu0 0
    %884 = vmatpush1.bf16.msra.mxu0 %v881
    %885 = vmatprep.subr.bf16.mxu0 0
    %886 = vmatpush1.bf16.msra.mxu0 0
    %887 = vmatprep.subr.bf16.mxu0 0
    %888 = vmatpush1.bf16.msra.mxu0 0
    %889 = vmatprep.subr.bf16.mxu0 0
    %890 = vmatpush1.bf16.msra.mxu0 0
    %891 = vmatprep.subr.bf16.mxu0 0
    %892 = vmatpush1.bf16.msra.mxu0 0
    %893 = vmatprep.subr.bf16.mxu0 0
    %894 = vmatpush1.bf16.msra.mxu0 0
    %895 = vmatprep.subr.bf16.mxu0 0
    %896 = vmatpush1.bf16.msra.mxu0 0
    %897 = vmatprep.subr.bf16.mxu0 0
    %898 = vmatpush1.bf16.msra.mxu0 0
    %899 = vmatprep.subr.bf16.mxu0 0
    %900 = vmatpush1.bf16.msra.mxu0 0
    %901 = vmatprep.subr.bf16.mxu0 0
    %902 = vmatpush1.bf16.msra.mxu0 0
    %903 = vmatprep.subr.bf16.mxu0 0
    %904 = vmatpush1.bf16.msra.mxu0 0
    %905 = vmatprep.subr.bf16.mxu0 0
    %906 = vmatpush1.bf16.msra.mxu0 0
    %907 = vmatprep.subr.bf16.mxu0 0
    %908 = vmatpush1.bf16.msra.mxu0 0
    %909 = vmatprep.subr.bf16.mxu0 0
    %910 = vmatpush1.bf16.msra.mxu0 0
    %911 = vmatprep.subr.bf16.mxu0 0
    %912 = vmatpush1.bf16.msra.mxu0 0
    %913 = vmatprep.subr.bf16.mxu0 0
    %914 = vmatpush1.bf16.msra.mxu0 0
    %915 = vmatprep.mubr.bf16.mxu0 0
    %916 = vmatmul.mubr.bf16.gmra.mrb[0].mxu0 %v197
    %v917 = vpop.f32.mrb[0].mxu0
    %v918 = vadd.f32 0.0, %v917
    %v919 = vpop.f32.mrb[0].mxu0
    %v920 = vpop.f32.mrb[0].mxu0
    %v921 = vadd.f32 0.0, %v920
    %v922 = vpop.f32.mrb[0].mxu0
    %923 = vmatprep.mubr.bf16.mxu0 0
    %924 = vmatmul.mubr.bf16.gmra.mrb[0].mxu0 %v200
    %v925 = vpop.f32.mrb[0].mxu0
    %v926 = vadd.f32 0.0, %v925
    %v927 = vpop.f32.mrb[0].mxu0
    %v928 = vpop.f32.mrb[0].mxu0
    %v929 = vadd.f32 0.0, %v928
    %v930 = vpop.f32.mrb[0].mxu0
    %931 = vmatprep.mubr.bf16.mxu0 0
    %932 = vmatmul.mubr.bf16.gmra.mrb[0].mxu0 %v203
    %v933 = vpop.f32.mrb[0].mxu0
    %v934 = vadd.f32 0.0, %v933
    %v935 = vpop.f32.mrb[0].mxu0
    %v936 = vpop.f32.mrb[0].mxu0
    %v937 = vadd.f32 0.0, %v936
    %v938 = vpop.f32.mrb[0].mxu0
    %939 = vmatprep.mubr.bf16.mxu0 0
    %940 = vmatmul.mubr.bf16.gmra.mrb[0].mxu0 %v206
    %v941 = vpop.f32.mrb[0].mxu0
    %v942 = vadd.f32 0.0, %v941
    %v943 = vpop.f32.mrb[0].mxu0
    %v944 = vpop.f32.mrb[0].mxu0
    %v945 = vadd.f32 0.0, %v944
    %v946 = vpop.f32.mrb[0].mxu0
    %947 = vmatprep.mubr.bf16.mxu0 0
    %948 = vmatmul.mubr.bf16.gmra.mrb[0].mxu0 %v209
    %v949 = vpop.f32.mrb[0].mxu0
    %v950 = vadd.f32 0.0, %v949
    %v951 = vpop.f32.mrb[0].mxu0
    %v952 = vpop.f32.mrb[0].mxu0
    %v953 = vadd.f32 0.0, %v952
    %v954 = vpop.f32.mrb[0].mxu0
    %955 = vmatprep.mubr.bf16.mxu0 0
    %956 = vmatmul.mubr.bf16.gmra.mrb[0].mxu0 %v212
    %v957 = vpop.f32.mrb[0].mxu0
    %v958 = vadd.f32 0.0, %v957
    %v959 = vpop.f32.mrb[0].mxu0
    %v960 = vpop.f32.mrb[0].mxu0
    %v961 = vadd.f32 0.0, %v960
    %v962 = vpop.f32.mrb[0].mxu0
    %963 = vmatprep.mubr.bf16.mxu0 0
    %964 = vmatmul.mubr.bf16.gmra.mrb[0].mxu0 %v215
    %v965 = vpop.f32.mrb[0].mxu0
    %v966 = vadd.f32 0.0, %v965
    %v967 = vpop.f32.mrb[0].mxu0
    %v968 = vpop.f32.mrb[0].mxu0
    %v969 = vadd.f32 0.0, %v968
    %v970 = vpop.f32.mrb[0].mxu0
    %971 = vmatprep.mubr.bf16.mxu0 0
    %972 = vmatmul.mubr.bf16.gmra.mrb[0].mxu0 %v218
    %v973 = vpop.f32.mrb[0].mxu0
    %v974 = vadd.f32 0.0, %v973
    %v975 = vpop.f32.mrb[0].mxu0
    %v976 = vpop.f32.mrb[0].mxu0
    %v977 = vadd.f32 0.0, %v976
    %v978 = vpop.f32.mrb[0].mxu0
    %979 = vdwg.mxu0
    %v980 = vpack.c.bf16 %v921, %v918
    %v981 = vpack.c.bf16 %v929, %v926
    %v982 = vpack.c.bf16 %v937, %v934
    %v983 = vpack.c.bf16 %v945, %v942
    %v984 = vpack.c.bf16 %v953, %v950
    %v985 = vpack.c.bf16 %v961, %v958
    %v986 = vpack.c.bf16 %v969, %v966
    %v987 = vpack.c.bf16 %v977, %v974
    %v988 = vmul.bf16 %v980, %v361
    %v989 = vmul.bf16 %v981, %v362
    %v990 = vmul.bf16 %v982, %v363
    %v991 = vmul.bf16 %v983, %v364
    %v992 = vmul.bf16 %v984, %v365
    %v993 = vmul.bf16 %v985, %v366
    %v994 = vmul.bf16 %v986, %v367
    %v995 = vmul.bf16 %v987, %v368
    %v997 = vsel %vm57, %v758, 0
    %v1000 = vsel %vm57, %v870, 0
    %v1003 = vsel %vm57, %v871, 0
    %v1006 = vsel %vm57, %v872, 0
    %v1009 = vsel %vm57, %v873, 0
    %v1012 = vsel %vm57, %v874, 0
    %v1015 = vsel %vm57, %v875, 0
    %v1018 = vsel %vm57, %v876, 0
    %v1021 = vsel %vm57, %v877, 0
    %1023 = vmatprep.subr.bf16.mxu0 0
    %1024 = vmatpush1.bf16.xpose.msra.mxu0 %v1000
    %1025 = vmatprep.subr.bf16.mxu0 0
    %1026 = vmatpush1.bf16.xpose.msra.mxu0 %v1003
    %1027 = vmatprep.subr.bf16.mxu0 0
    %1028 = vmatpush1.bf16.xpose.msra.mxu0 %v1006
    %1029 = vmatprep.subr.bf16.mxu0 0
    %1030 = vmatpush1.bf16.xpose.msra.mxu0 %v1009
    %1031 = vmatprep.subr.bf16.mxu0 0
    %1032 = vmatpush1.bf16.xpose.msra.mxu0 %v1012
    %1033 = vmatprep.subr.bf16.mxu0 0
    %1034 = vmatpush1.bf16.xpose.msra.mxu0 %v1015
    %1035 = vmatprep.subr.bf16.mxu0 0
    %1036 = vmatpush1.bf16.xpose.msra.mxu0 %v1018
    %1037 = vmatprep.subr.bf16.mxu0 0
    %1038 = vmatpush1.bf16.xpose.msra.mxu0 %v1021
    %1039 = vmatprep.subr.bf16.mxu0 0
    %1040 = vmatpush1.bf16.xpose.msra.mxu0 0
    %1041 = vmatprep.subr.bf16.mxu0 0
    %1042 = vmatpush1.bf16.xpose.msra.mxu0 0
    %1043 = vmatprep.subr.bf16.mxu0 0
    %1044 = vmatpush1.bf16.xpose.msra.mxu0 0
    %1045 = vmatprep.subr.bf16.mxu0 0
    %1046 = vmatpush1.bf16.xpose.msra.mxu0 0
    %1047 = vmatprep.subr.bf16.mxu0 0
    %1048 = vmatpush1.bf16.xpose.msra.mxu0 0
    %1049 = vmatprep.subr.bf16.mxu0 0
    %1050 = vmatpush1.bf16.xpose.msra.mxu0 0
    %1051 = vmatprep.subr.bf16.mxu0 0
    %1052 = vmatpush1.bf16.xpose.msra.mxu0 0
    %1053 = vmatprep.subr.bf16.mxu0 0
    %1054 = vmatpush1.bf16.xpose.msra.mxu0 0
    %1055 = vmatprep.mubr.bf16.mxu0 0
    %1056 = vmatmul.mubr.bf16.gmra.mrb[0].mxu0 %v997
    %v1057 = vpop.f32.mrb[0].mxu0
    %v1058 = vadd.f32 %v134, %v1057
    %v1059 = vpop.f32.mrb[0].mxu0
    %v1060 = vpop.f32.mrb[0].mxu0
    %v1061 = vpop.f32.mrb[0].mxu0
    %1062 = vdwg.mxu0
    %1063 = vmax.xlane.f32.xlu0 %v1058
    %v1064 = vpop.xlane.xlu0 %1063
    %v1065 = vsub.f32 %v1058, %v1064
    %v1066 = vmul.f32 %v1065, 1.442695
    %v1067 = vpow.pop %v1066
    %v1068 = vpack.c.bf16 %v1067, %v1067
    %1069 = vmatprep.subr.bf16.mxu0 0
    %1070 = vmatpush1.bf16.msra.mxu0 %v608
    %1071 = vmatprep.subr.bf16.mxu0 0
    %1072 = vmatpush1.bf16.msra.mxu0 %v609
    %1073 = vmatprep.subr.bf16.mxu0 0
    %1074 = vmatpush1.bf16.msra.mxu0 %v610
    %1075 = vmatprep.subr.bf16.mxu0 0
    %1076 = vmatpush1.bf16.msra.mxu0 %v611
    %1077 = vmatprep.subr.bf16.mxu0 0
    %1078 = vmatpush1.bf16.msra.mxu0 %v612
    %1079 = vmatprep.subr.bf16.mxu0 0
    %1080 = vmatpush1.bf16.msra.mxu0 %v613
    %1081 = vmatprep.subr.bf16.mxu0 0
    %1082 = vmatpush1.bf16.msra.mxu0 %v614
    %1083 = vmatprep.subr.bf16.mxu0 0
    %1084 = vmatpush1.bf16.msra.mxu0 %v615
    %1085 = vmatprep.subr.bf16.mxu0 0
    %1086 = vmatpush1.bf16.msra.mxu0 0
    %1087 = vmatprep.subr.bf16.mxu0 0
    %1088 = vmatpush1.bf16.msra.mxu0 0
    %1089 = vmatprep.subr.bf16.mxu0 0
    %1090 = vmatpush1.bf16.msra.mxu0 0
    %1091 = vmatprep.subr.bf16.mxu0 0
    %1092 = vmatpush1.bf16.msra.mxu0 0
    %1093 = vmatprep.subr.bf16.mxu0 0
    %1094 = vmatpush1.bf16.msra.mxu0 0
    %1095 = vmatprep.subr.bf16.mxu0 0
    %1096 = vmatpush1.bf16.msra.mxu0 0
    %1097 = vmatprep.subr.bf16.mxu0 0
    %1098 = vmatpush1.bf16.msra.mxu0 0
    %1099 = vmatprep.subr.bf16.mxu0 0
    %1100 = vmatpush1.bf16.msra.mxu0 0
    %1101 = vmatprep.mubr.bf16.mxu0 0
    %1102 = vmatmul.mubr.bf16.gmra.mrb[0].mxu0 %v1068
    %v1103 = vpop.f32.mrb[0].mxu0
    %v1104 = vadd.f32 0.0, %v1103
    %v1105 = vpop.f32.mrb[0].mxu0
    %v1106 = vpop.f32.mrb[0].mxu0
    %v1107 = vpop.f32.mrb[0].mxu0
    %1108 = vdwg.mxu0
    %v1109 = vrcp.pop %v1104
    %v1110 = vmul.f32 %v1067, %v1109
    %v1111 = vpack.c.bf16 %v1110, %v1110
    %1112 = vmatprep.subr.bf16.mxu0 0
    %1113 = vmatpush1.bf16.msra.mxu0 %v988
    %1114 = vmatprep.subr.bf16.mxu0 0
    %1115 = vmatpush1.bf16.msra.mxu0 %v989
    %1116 = vmatprep.subr.bf16.mxu0 0
    %1117 = vmatpush1.bf16.msra.mxu0 %v990
    %1118 = vmatprep.subr.bf16.mxu0 0
    %1119 = vmatpush1.bf16.msra.mxu0 %v991
    %1120 = vmatprep.subr.bf16.mxu0 0
    %1121 = vmatpush1.bf16.msra.mxu0 %v992
    %1122 = vmatprep.subr.bf16.mxu0 0
    %1123 = vmatpush1.bf16.msra.mxu0 %v993
    %1124 = vmatprep.subr.bf16.mxu0 0
    %1125 = vmatpush1.bf16.msra.mxu0 %v994
    %1126 = vmatprep.subr.bf16.mxu0 0
    %1127 = vmatpush1.bf16.msra.mxu0 %v995
    %1128 = vmatprep.subr.bf16.mxu0 0
    %1129 = vmatpush1.bf16.msra.mxu0 0
    %1130 = vmatprep.subr.bf16.mxu0 0
    %1131 = vmatpush1.bf16.msra.mxu0 0
    %1132 = vmatprep.subr.bf16.mxu0 0
    %1133 = vmatpush1.bf16.msra.mxu0 0
    %1134 = vmatprep.subr.bf16.mxu0 0
    %1135 = vmatpush1.bf16.msra.mxu0 0
    %1136 = vmatprep.subr.bf16.mxu0 0
    %1137 = vmatpush1.bf16.msra.mxu0 0
    %1138 = vmatprep.subr.bf16.mxu0 0
    %1139 = vmatpush1.bf16.msra.mxu0 0
    %1140 = vmatprep.subr.bf16.mxu0 0
    %1141 = vmatpush1.bf16.msra.mxu0 0
    %1142 = vmatprep.subr.bf16.mxu0 0
    %1143 = vmatpush1.bf16.msra.mxu0 0
    %1144 = vmatprep.mubr.bf16.mxu0 0
    %1145 = vmatmul.mubr.bf16.gmra.mrb[0].mxu0 %v1111
    %v1146 = vpop.f32.mrb[0].mxu0
    %v1147 = vadd.f32 0.0, %v1146
    %v1148 = vpop.f32.mrb[0].mxu0
    %v1149 = vpop.f32.mrb[0].mxu0
    %v1150 = vpop.f32.mrb[0].mxu0
    %1151 = vdwg.mxu0
    %s1152 = scalar_lea.vmem [#allocation2], 8
    %1153 = vst.msk [vmem:[%s1152] sm:$0xff] %vm57, %v1147
    %1154 = vmatprep.subr.bf16.mxu0 0
    %1155 = vmatpush1.bf16.msra.mxu0 %v184
    %1156 = vmatprep.subr.bf16.mxu0 0
    %1157 = vmatpush1.bf16.msra.mxu0 %v185
    %1158 = vmatprep.subr.bf16.mxu0 0
    %1159 = vmatpush1.bf16.msra.mxu0 %v186
    %1160 = vmatprep.subr.bf16.mxu0 0
    %1161 = vmatpush1.bf16.msra.mxu0 %v187
    %1162 = vmatprep.subr.bf16.mxu0 0
    %1163 = vmatpush1.bf16.msra.mxu0 %v188
    %1164 = vmatprep.subr.bf16.mxu0 0
    %1165 = vmatpush1.bf16.msra.mxu0 %v189
    %1166 = vmatprep.subr.bf16.mxu0 0
    %1167 = vmatpush1.bf16.msra.mxu0 %v190
    %1168 = vmatprep.subr.bf16.mxu0 0
    %1169 = vmatpush1.bf16.msra.mxu0 %v191
    %1170 = vmatprep.subr.bf16.mxu0 0
    %1171 = vmatpush1.bf16.msra.mxu0 0
    %1172 = vmatprep.subr.bf16.mxu0 0
    %1173 = vmatpush1.bf16.msra.mxu0 0
    %1174 = vmatprep.subr.bf16.mxu0 0
    %1175 = vmatpush1.bf16.msra.mxu0 0
    %1176 = vmatprep.subr.bf16.mxu0 0
    %1177 = vmatpush1.bf16.msra.mxu0 0
    %1178 = vmatprep.subr.bf16.mxu0 0
    %1179 = vmatpush1.bf16.msra.mxu0 0
    %1180 = vmatprep.subr.bf16.mxu0 0
    %1181 = vmatpush1.bf16.msra.mxu0 0
    %1182 = vmatprep.subr.bf16.mxu0 0
    %1183 = vmatpush1.bf16.msra.mxu0 0
    %1184 = vmatprep.subr.bf16.mxu0 0
    %1185 = vmatpush1.bf16.msra.mxu0 0
    %1186 = vmatprep.mubr.bf16.mxu0 0
    %1187 = vmatmul.mubr.bf16.gmra.mrb[0].mxu0 %v1111
    %v1188 = vpop.f32.mrb[0].mxu0
    %v1189 = vadd.f32 0.0, %v1188
    %v1190 = vpop.f32.mrb[0].mxu0
    %v1191 = vpop.f32.mrb[0].mxu0
    %v1192 = vpop.f32.mrb[0].mxu0
    %1193 = vdwg.mxu0
    %v1194 = vmul.f32 %v1189, 0.0625
    %s1195 = scalar_lea.vmem [#allocation4], 8
    %1196 = vst.msk [vmem:[%s1195] sm:$0xff] %vm195, %v1194
    // Predicated region
    $region30: #{tpu_custom_call.1} parent=1 // pred_check
      _
    $region31: #{tpu_custom_call.1} parent=1 // pred_check_branch
      %1198 = sbr.rel (0) target = $region33
    $region32: #{tpu_custom_call.1} parent=1 // pred_region
      %s1200 = ssub.s32 256, 256
      %1201 = vsyncadd [#allocation3], %s1200
      %s1202 = sshll.u32 [#allocation2], 4
      %s1203 = int_to_ptr.vmem [resolvable:$true] %s1202
      %1208 = dma.vmem_to_hbm [thread:$0]  %s1203, 256, %s7, [#allocation3], 128, 128, 8
    $region33: #{tpu_custom_call.1} parent=1 // pred_fallthru
      _
    // Predicated region
    $region34: #{tpu_custom_call.1} parent=1 // pred_check
      _
    $region35: #{tpu_custom_call.1} parent=1 // pred_check_branch
      %1210 = sbr.rel (0) target = $region37
    $region36: #{tpu_custom_call.1} parent=1 // pred_region
      %s1212 = ssub.s32 256, 256
      %1213 = vsyncadd [#allocation5], %s1212
      %s1214 = sshll.u32 [#allocation4], 4
      %s1215 = int_to_ptr.vmem [resolvable:$true] %s1214
      %1220 = dma.vmem_to_hbm [thread:$0]  %s1215, 256, %s8, [#allocation5], 128, 128, 8
    $region37: #{tpu_custom_call.1} parent=1 // pred_fallthru
      _
    // Predicated region
    $region38: #{tpu_custom_call.1} parent=1 // pred_check
      _
    $region39: #{tpu_custom_call.1} parent=1 // pred_check_branch
      %1222 = sbr.rel (0) target = $region41
    $region40: #{tpu_custom_call.1} parent=1 // pred_region
      %1223 = dma.done [#allocation3], 256
    $region41: #{tpu_custom_call.1} parent=1 // pred_fallthru
      _
    // Predicated region
    $region42: #{tpu_custom_call.1} parent=1 // pred_check
      _
    $region43: #{tpu_custom_call.1} parent=1 // pred_check_branch
      %1225 = sbr.rel (0) target = $region45
    $region44: #{tpu_custom_call.1} parent=1 // pred_region
      %1226 = dma.done [#allocation5], 256
    $region45: #{tpu_custom_call.1} parent=1 // pred_fallthru
      _
    %1227 = vsyncpa [#allocation3], 1
    %1228 = vsyncpa [#allocation5], 1

</llo_original>
